<compile_context>
chip_gen: v6e
topology: v6e:2x2x1
jax: 0.10.0
libtpu: 0.0.40
codegen_flags: <defaults>
</compile_context>

<pallas_src>
import math

import jax
import jax.numpy as jnp
from jax import lax
from jax.experimental import pallas as pl
from jax.experimental.pallas import tpu as pltpu


def _round_up(v, m):
    return ((v + m - 1) // m) * m


def _level_config():
    """Per-TPU-generation tile sizes, MXU operand dtype and scoped-VMEM limit."""
    try:
        kind = jax.devices()[0].device_kind.lower()
    except Exception:
        kind = ""
    if "v6" in kind:
        # 128 MiB VMEM, bf16 VALU: large tiles, raise the 32 MiB scoped default.
        return dict(mxu_dtype=jnp.bfloat16, max_chunk=512, max_gblk=2048,
                    vmem_limit_bytes=96 * 1024 * 1024)
    if "v7" in kind:
        # Only 64 MiB VMEM per TC: halve the tiles, leave pipelining headroom.
        return dict(mxu_dtype=jnp.bfloat16, max_chunk=256, max_gblk=1024,
                    vmem_limit_bytes=44 * 1024 * 1024)
    if "v5 lite" in kind or "v5e" in kind or "v5litepod" in kind:
        # v5e VPU has no bf16: keep MXU operands f32 (MXU is heavily
        # under-subscribed here, so the f32 matmul rate is irrelevant).
        return dict(mxu_dtype=jnp.float32, max_chunk=512, max_gblk=2048,
                    vmem_limit_bytes=64 * 1024 * 1024)
    # Unknown generation: conservative tiles, f32 everywhere, default limits.
    return dict(mxu_dtype=jnp.float32, max_chunk=256, max_gblk=1024,
                vmem_limit_bytes=None)


# ----------------------------------------------------------------------------
# Pallas kernel: fused initialize_grid_ball + propose_grid (scatter-add via
# one-hot matmuls) + hoisted preprocessing (1x1 conv) + count normalization.
# Grid = (batch, voxel_block, point_chunk); per-level shapes are static.
# ----------------------------------------------------------------------------
def make_grid_kernel(nc, g, C, nr, G_blk, mxu_dtype):
    thr2 = 0.87 * 0.87   # squared ball radius (sqrt dropped)

    def kernel(x_ref, W_ref, b_ref, out_ref, acc_ref):
        vblk = pl.program_id(1)
        chunk = pl.program_id(2)

        @pl.when(chunk == 0)
        def _init():
            acc_ref[...] = jnp.zeros_like(acc_ref)

        x = x_ref[0]                                   # (3, nc), points on lanes

        # initialize_grid_ball: map coords -> grid space (matches PyTorch branch).
        if nr == 0.5:
            reshaped = (x + nr) * g - nr
        else:
            reshaped = (x + nr) / 2.0 * g - nr / 2.0

        ind1 = jnp.clip(jnp.floor(reshaped), 0.0, float(g - 1))   # (3, nc)
        ind2 = jnp.clip(jnp.ceil(reshaped), 0.0, float(g - 1))    # (3, nc)

        # Sublane-dense corner math: all 8 trilinear corners live on the sublane
        # axis of (8, nc) vregs (8x VALU density vs 8 separate (1, nc) rows).
        # Corner order matches the PyTorch list: x-bit = c>>2, y-bit = c>>1, z-bit = c.
        cid = lax.broadcasted_iota(jnp.int32, (8, nc), 0)
        mx = (cid & 4) != 0
        my = (cid & 2) != 0
        mz = (cid & 1) != 0

        cx = jnp.where(mx, ind2[0:1], ind1[0:1])       # (8, nc) corner coords
        cy = jnp.where(my, ind2[1:2], ind1[1:2])
        cz = jnp.where(mz, ind2[2:3], ind1[2:3])

        rx = reshaped[0:1] - cx                        # (8, nc) residuals
        ry = reshaped[1:2] - cy
        rz = reshaped[2:3] - cz

        # Ball test on squared distance (no sqrt); wj in {0, 1}.
        wj = ((rx * rx + ry * ry + rz * rz) < thr2).astype(jnp.float32)

        srx = rx * wj
        sry = ry * wj
        srz = rz * wj

        # Flat voxel index in int32 (exact for large g), shifted into the
        # current voxel block's local coordinates (cheaper than offsetting the
        # (G_blk, nc) iota).
        idx = (cx.astype(jnp.int32) * (g * g)
               + cy.astype(jnp.int32) * g
               + cz.astype(jnp.int32)) - vblk * G_blk  # (8, nc)

        # Corner-invariant iota, built once per chunk.
        iota = lax.broadcasted_iota(jnp.int32, (G_blk, nc), 0)

        # Scatter-add via one-hot matmuls: one (4, nc) x (nc, G_blk) dot per
        # corner keeps the live one-hot bounded to (G_blk, nc) while feeding
        # each one-hot through the MXU exactly once.  Only 4 rows (masked
        # residuals + count) are accumulated; the conv is applied at finalize.
        # NOTE: on v6e/v7x the residual rows are rounded to bf16 before the
        # matmul (~1e-3 rel. deviation vs the f32 PyTorch reference); the
        # one-hot and count row are exact in bf16.  v5e/unknown stay f32.
        dn = (((1,), (1,)), ((), ()))
        update = None
        for c in range(8):
            lhs = jnp.concatenate(
                [srx[c:c + 1], sry[c:c + 1], srz[c:c + 1], wj[c:c + 1]],
                axis=0)                                            # (4, nc)
            onehot = (iota == idx[c:c + 1]).astype(mxu_dtype)      # (G_blk, nc)
            part = lax.dot_general(lhs.astype(mxu_dtype), onehot, dn,
                                   preferred_element_type=jnp.float32)
            update = part if update is None else update + part
        acc_ref[...] += update                                     # (4, G_blk)

        @pl.when(chunk == pl.num_programs(2) - 1)
        def _finalize():
            acc = acc_ref[...]                         # (4, G_blk)
            cnt = acc[3:4, :]                          # (1, G_blk) = sum of wj
            W = W_ref[...]                             # (C, 3)
            # Hoisted 1x1 conv: sum_j wj*(W r_j + b) == W (sum wj r_j) + b sum wj.
            feat = (W[:, 0:1] * acc[0:1, :]
                    + W[:, 1:2] * acc[1:2, :]
                    + W[:, 2:3] * acc[2:3, :]
                    + b_ref[...] * cnt)                # (C, G_blk)
            # Exact divide (once per output block), matching `x /= max(count, 1)`.
            out_ref[0] = feat / jnp.maximum(cnt, 1.0)  # lane-dense store

    return kernel


def grid_encode_level(x, W, bias, g, nr, cfg=None):
    """x: (B, 3, N) points; W: (C, 3); bias: (C, 1) -> (B, C, g, g, g)."""
    if cfg is None:
        cfg = _level_config()
    b, _, n = x.shape
    C = W.shape[0]
    G = g * g * g

    # Point-chunk: multiple of 128 (lane-dense contraction).  Pad N with a
    # far-outside sentinel so padded points fail the ball test (wj == 0) and
    # contribute to neither features nor counts.
    nc = min(cfg["max_chunk"], _round_up(n, 128))
    n_pad = _round_up(n, nc)
    if n_pad != n:
        pad = jnp.full((b, 3, n_pad - n), 1e3, x.dtype)
        x = jnp.concatenate([x, pad], axis=2)
    num_chunks = n_pad // nc

    # Voxel-axis tiling: bounds the (G_blk, nc) one-hot / accumulator in VMEM
    # for large g and provides a second parallel axis (v7x dual TensorCore).
    G_blk = min(cfg["max_gblk"], _round_up(G, 128))
    G_pad = _round_up(G, G_blk)
    num_vblk = G_pad // G_blk

    out = pl.pallas_call(
        make_grid_kernel(nc, g, C, nr, G_blk, cfg["mxu_dtype"]),
        out_shape=jax.ShapeDtypeStruct((b, C, G_pad), jnp.float32),
        grid=(b, num_vblk, num_chunks),
        in_specs=[
            pl.BlockSpec((1, 3, nc), lambda i, v, c: (i, 0, c)),
            pl.BlockSpec((C, 3), lambda i, v, c: (0, 0)),
            pl.BlockSpec((C, 1), lambda i, v, c: (0, 0)),
        ],
        out_specs=pl.BlockSpec((1, C, G_blk), lambda i, v, c: (i, 0, v)),
        scratch_shapes=[pltpu.VMEM((4, G_blk), jnp.float32)],
        compiler_params=pltpu.CompilerParams(
            dimension_semantics=("parallel", "parallel", "arbitrary"),
            vmem_limit_bytes=cfg["vmem_limit_bytes"]),
    )(x, W, bias)

    return out[:, :, :G].reshape(b, C, g, g, g)


# ----------------------------------------------------------------------------
# Plain-JAX glue reproducing the pointnet2 custom CUDA ops.
# TODO(synk): furthest_point_sample / gather_operation are external CUDA ops;
# they are sequential/gather-style and are implemented in plain JAX, not Pallas.
# ----------------------------------------------------------------------------
def furthest_point_sample(xyz, npoint):
    """xyz: (B, N, 3) -> indices (B, npoint) int32 (starts at index 0)."""
    n = xyz.shape[1]

    def one(pts):
        def body(i, state):
            idxs, dists, last = state
            d = jnp.sum((pts - pts[last]) ** 2, axis=-1)
            dists = jnp.minimum(dists, d)
            nxt = jnp.argmax(dists).astype(jnp.int32)
            return idxs.at[i].set(nxt), dists, nxt

        idxs0 = jnp.zeros((npoint,), jnp.int32)
        d0 = jnp.full((n,), 1e10, jnp.float32)
        idxs, _, _ = lax.fori_loop(1, npoint, body, (idxs0, d0, jnp.int32(0)))
        return idxs

    return jax.vmap(one)(xyz)


def gather_operation(x, idx):
    """x: (B, 3, N), idx: (B, M) -> (B, 3, M)."""
    b, c, _ = x.shape
    m = idx.shape[1]
    full_idx = jnp.broadcast_to(idx[:, None, :].astype(jnp.int32), (b, c, m))
    return jnp.take_along_axis(x, full_idx, axis=2)


def grid_encoder_forward(x, params, grid_size, normalize_ratio):
    """GridEncoder.forward: x (B, 3, N) -> list of (B, C, g_i, g_i, g_i)."""
    b, _, n = x.shape
    cfg = _level_config()
    outs = []
    for i in range(int(math.log2(grid_size))):
        m = n // (2 ** i)
        idx = furthest_point_sample(jnp.transpose(x, (0, 2, 1)), m)
        x = gather_operation(x, idx)
        g = grid_size // (2 ** i)
        W, bias = params[i]
        outs.append(grid_encode_level(x, W, bias, g, normalize_ratio, cfg))
    return outs


if __name__ == "__main__":
    B, N, GRID_SIZE, C = 2, 64, 4, 8
    NR = 0.5  # args.normalize_ratio

    key = jax.random.PRNGKey(0)
    kx, kp = jax.random.split(key)
    # points in [-normalize_ratio, normalize_ratio] as asserted by the module
    x = jax.random.uniform(kx, (B, 3, N), jnp.float32, minval=-NR, maxval=NR)

    # TODO(synk): `preprocessing[i]` is an injected module; modeled here as a
    # deterministic 1x1 Conv2d(3 -> C) per level.
    params = []
    for _ in range(int(math.log2(GRID_SIZE))):
        kp, kW, kb = jax.random.split(kp, 3)
        W = jax.random.normal(kW, (C, 3), jnp.float32) * 0.1
        bias = jax.random.normal(kb, (C, 1), jnp.float32) * 0.01
        params.append((W, bias))

    outs = grid_encoder_forward(x, params, GRID_SIZE, NR)
    for o in outs:
        jax.block_until_ready(o)
    print("KERNEL_OK")
</pallas_src>

<mosaic_0001>
module attributes {stable_mosaic.version = 11 : i64} {
  func.func @kernel(%arg0: i32, %arg1: i32, %arg2: i32, %arg3: memref<1x3x128xf32, #tpu.memory_space<vmem>>, %arg4: memref<8x3xf32, #tpu.memory_space<vmem>>, %arg5: memref<8x1xf32, #tpu.memory_space<vmem>>, %arg6: memref<1x8x128xf32, #tpu.memory_space<vmem>>, %arg7: memref<4x128xf32, #tpu.memory_space<vmem>>) attributes {dimension_semantics = [#tpu.dimension_semantics<parallel>, #tpu.dimension_semantics<parallel>, #tpu.dimension_semantics<arbitrary>], iteration_bounds = array<i64: 2, 1, 1>, scalar_prefetch = 0 : i64, scratch_operands = 1 : i64, tpu.core_type = #tpu.core_type<tc>, window_params = [{transform_indices = @transform_0, window_bounds = array<i64: 1, 3, 128>}, {pipeline_mode = #tpu.pipeline_mode<synchronous>, transform_indices = @transform_1, window_bounds = array<i64: 8, 3>}, {pipeline_mode = #tpu.pipeline_mode<synchronous>, transform_indices = @transform_2, window_bounds = array<i64: 8, 1>}, {transform_indices = @transform_3, window_bounds = array<i64: 1, 8, 128>}]} {
    %c0_i32 = arith.constant 0 : i32
    %0 = arith.cmpi eq, %arg2, %c0_i32 : i32
    %1 = arith.extui %0 : i1 to i32
    %c0_i32_0 = arith.constant 0 : i32
    %2 = arith.cmpi ne, %1, %c0_i32_0 : i32
    scf.if %2 {
      %cst_28 = arith.constant 0.000000e+00 : f32
      %190 = vector.broadcast %cst_28 : f32 to vector<4x128xf32>
      %c0_29 = arith.constant 0 : index
      %c0_30 = arith.constant 0 : index
      %191 = vector.load %arg7[%c0_29, %c0_30] : memref<4x128xf32, #tpu.memory_space<vmem>>, vector<4x128xf32>
      tpu.vector_store %arg7[%c0_29, %c0_30], %190 {strides = array<i32>} : memref<4x128xf32, #tpu.memory_space<vmem>>, vector<4x128xf32>,
    } else {
    }
    %c0 = arith.constant 0 : index
    %c0_1 = arith.constant 0 : index
    %c0_2 = arith.constant 0 : index
    %3 = vector.load %arg3[%c0, %c0_1, %c0_2] : memref<1x3x128xf32, #tpu.memory_space<vmem>>, vector<1x3x128xf32>
    %4 = vector.shape_cast %3 : vector<1x3x128xf32> to vector<3x128xf32>
    %cst = arith.constant 5.000000e-01 : f32
    %5 = vector.broadcast %cst : f32 to vector<3x128xf32>
    %6 = arith.addf %4, %5 : vector<3x128xf32>
    %cst_3 = arith.constant 4.000000e+00 : f32
    %7 = vector.broadcast %cst_3 : f32 to vector<3x128xf32>
    %8 = arith.mulf %6, %7 : vector<3x128xf32>
    %cst_4 = arith.constant 5.000000e-01 : f32
    %9 = vector.broadcast %cst_4 : f32 to vector<3x128xf32>
    %10 = arith.subf %8, %9 : vector<3x128xf32>
    %11 = math.floor %10 : vector<3x128xf32>
    %cst_5 = arith.constant 0.000000e+00 : f32
    %cst_6 = arith.constant 3.000000e+00 : f32
    %12 = vector.broadcast %cst_5 : f32 to vector<3x128xf32>
    %13 = arith.maximumf %12, %11 : vector<3x128xf32>
    %14 = vector.broadcast %cst_6 : f32 to vector<3x128xf32>
    %15 = arith.minimumf %14, %13 : vector<3x128xf32>
    %16 = math.ceil %10 : vector<3x128xf32>
    %cst_7 = arith.constant 0.000000e+00 : f32
    %cst_8 = arith.constant 3.000000e+00 : f32
    %17 = vector.broadcast %cst_7 : f32 to vector<3x128xf32>
    %18 = arith.maximumf %17, %16 : vector<3x128xf32>
    %19 = vector.broadcast %cst_8 : f32 to vector<3x128xf32>
    %20 = arith.minimumf %19, %18 : vector<3x128xf32>
    %21 = tpu.iota {dimensions = array<i32: 0>} : vector<8x128xi32>
    %c4_i32 = arith.constant 4 : i32
    %22 = vector.broadcast %c4_i32 : i32 to vector<8x128xi32>
    %23 = arith.andi %21, %22 : vector<8x128xi32>
    %c0_i32_9 = arith.constant 0 : i32
    %24 = vector.broadcast %c0_i32_9 : i32 to vector<8x128xi32>
    %25 = arith.cmpi ne, %23, %24 : vector<8x128xi32>
    %c2_i32 = arith.constant 2 : i32
    %26 = vector.broadcast %c2_i32 : i32 to vector<8x128xi32>
    %27 = arith.andi %21, %26 : vector<8x128xi32>
    %c0_i32_10 = arith.constant 0 : i32
    %28 = vector.broadcast %c0_i32_10 : i32 to vector<8x128xi32>
    %29 = arith.cmpi ne, %27, %28 : vector<8x128xi32>
    %c1_i32 = arith.constant 1 : i32
    %30 = vector.broadcast %c1_i32 : i32 to vector<8x128xi32>
    %31 = arith.andi %21, %30 : vector<8x128xi32>
    %c0_i32_11 = arith.constant 0 : i32
    %32 = vector.broadcast %c0_i32_11 : i32 to vector<8x128xi32>
    %33 = arith.cmpi ne, %31, %32 : vector<8x128xi32>
    %34 = vector.extract_strided_slice %20 {offsets = [0, 0], sizes = [1, 128], strides = [1, 1]} : vector<3x128xf32> to vector<1x128xf32>
    %35 = vector.extract_strided_slice %15 {offsets = [0, 0], sizes = [1, 128], strides = [1, 1]} : vector<3x128xf32> to vector<1x128xf32>
    %36 = vector.shape_cast %34 : vector<1x128xf32> to vector<1x128xf32>
    %37 = vector.broadcast %36 : vector<1x128xf32> to vector<8x128xf32>
    %38 = vector.shape_cast %35 : vector<1x128xf32> to vector<1x128xf32>
    %39 = vector.broadcast %38 : vector<1x128xf32> to vector<8x128xf32>
    %40 = arith.select %25, %37, %39 : vector<8x128xi1>, vector<8x128xf32>
    %41 = vector.extract_strided_slice %20 {offsets = [1, 0], sizes = [1, 128], strides = [1, 1]} : vector<3x128xf32> to vector<1x128xf32>
    %42 = vector.extract_strided_slice %15 {offsets = [1, 0], sizes = [1, 128], strides = [1, 1]} : vector<3x128xf32> to vector<1x128xf32>
    %43 = vector.shape_cast %41 : vector<1x128xf32> to vector<1x128xf32>
    %44 = vector.broadcast %43 : vector<1x128xf32> to vector<8x128xf32>
    %45 = vector.shape_cast %42 : vector<1x128xf32> to vector<1x128xf32>
    %46 = vector.broadcast %45 : vector<1x128xf32> to vector<8x128xf32>
    %47 = arith.select %29, %44, %46 : vector<8x128xi1>, vector<8x128xf32>
    %48 = vector.extract_strided_slice %20 {offsets = [2, 0], sizes = [1, 128], strides = [1, 1]} : vector<3x128xf32> to vector<1x128xf32>
    %49 = vector.extract_strided_slice %15 {offsets = [2, 0], sizes = [1, 128], strides = [1, 1]} : vector<3x128xf32> to vector<1x128xf32>
    %50 = vector.shape_cast %48 : vector<1x128xf32> to vector<1x128xf32>
    %51 = vector.broadcast %50 : vector<1x128xf32> to vector<8x128xf32>
    %52 = vector.shape_cast %49 : vector<1x128xf32> to vector<1x128xf32>
    %53 = vector.broadcast %52 : vector<1x128xf32> to vector<8x128xf32>
    %54 = arith.select %33, %51, %53 : vector<8x128xi1>, vector<8x128xf32>
    %55 = vector.extract_strided_slice %10 {offsets = [0, 0], sizes = [1, 128], strides = [1, 1]} : vector<3x128xf32> to vector<1x128xf32>
    %56 = vector.broadcast %55 : vector<1x128xf32> to vector<8x128xf32>
    %57 = arith.subf %56, %40 : vector<8x128xf32>
    %58 = vector.extract_strided_slice %10 {offsets = [1, 0], sizes = [1, 128], strides = [1, 1]} : vector<3x128xf32> to vector<1x128xf32>
    %59 = vector.broadcast %58 : vector<1x128xf32> to vector<8x128xf32>
    %60 = arith.subf %59, %47 : vector<8x128xf32>
    %61 = vector.extract_strided_slice %10 {offsets = [2, 0], sizes = [1, 128], strides = [1, 1]} : vector<3x128xf32> to vector<1x128xf32>
    %62 = vector.broadcast %61 : vector<1x128xf32> to vector<8x128xf32>
    %63 = arith.subf %62, %54 : vector<8x128xf32>
    %64 = arith.mulf %57, %57 : vector<8x128xf32>
    %65 = arith.mulf %60, %60 : vector<8x128xf32>
    %66 = arith.addf %64, %65 : vector<8x128xf32>
    %67 = arith.mulf %63, %63 : vector<8x128xf32>
    %68 = arith.addf %66, %67 : vector<8x128xf32>
    %cst_12 = arith.constant 7.569000e-01 : f32
    %69 = vector.broadcast %cst_12 : f32 to vector<8x128xf32>
    %70 = arith.cmpf olt, %68, %69 : vector<8x128xf32>
    %71 = arith.extui %70 : vector<8x128xi1> to vector<8x128xi32>
    %72 = arith.sitofp %71 : vector<8x128xi32> to vector<8x128xf32>
    %73 = arith.mulf %57, %72 : vector<8x128xf32>
    %74 = arith.mulf %60, %72 : vector<8x128xf32>
    %75 = arith.mulf %63, %72 : vector<8x128xf32>
    %76 = arith.fptosi %40 : vector<8x128xf32> to vector<8x128xi32>
    %c16_i32 = arith.constant 16 : i32
    %77 = vector.broadcast %c16_i32 : i32 to vector<8x128xi32>
    %78 = arith.muli %76, %77 : vector<8x128xi32>
    %79 = arith.fptosi %47 : vector<8x128xf32> to vector<8x128xi32>
    %c4_i32_13 = arith.constant 4 : i32
    %80 = vector.broadcast %c4_i32_13 : i32 to vector<8x128xi32>
    %81 = arith.muli %79, %80 : vector<8x128xi32>
    %82 = arith.addi %78, %81 : vector<8x128xi32>
    %83 = arith.fptosi %54 : vector<8x128xf32> to vector<8x128xi32>
    %84 = arith.addi %82, %83 : vector<8x128xi32>
    %c128_i32 = arith.constant 128 : i32
    %85 = arith.muli %arg1, %c128_i32 : i32
    %86 = vector.broadcast %85 : i32 to vector<8x128xi32>
    %87 = arith.subi %84, %86 : vector<8x128xi32>
    %88 = tpu.iota {dimensions = array<i32: 0>} : vector<128x128xi32>
    %89 = vector.extract_strided_slice %73 {offsets = [0, 0], sizes = [1, 128], strides = [1, 1]} : vector<8x128xf32> to vector<1x128xf32>
    %90 = vector.extract_strided_slice %74 {offsets = [0, 0], sizes = [1, 128], strides = [1, 1]} : vector<8x128xf32> to vector<1x128xf32>
    %91 = vector.extract_strided_slice %75 {offsets = [0, 0], sizes = [1, 128], strides = [1, 1]} : vector<8x128xf32> to vector<1x128xf32>
    %92 = vector.extract_strided_slice %72 {offsets = [0, 0], sizes = [1, 128], strides = [1, 1]} : vector<8x128xf32> to vector<1x128xf32>
    %93 = tpu.concatenate %89, %90, %91, %92 in 0 : vector<1x128xf32>, vector<1x128xf32>, vector<1x128xf32>, vector<1x128xf32> -> vector<4x128xf32>
    %94 = vector.extract_strided_slice %87 {offsets = [0, 0], sizes = [1, 128], strides = [1, 1]} : vector<8x128xi32> to vector<1x128xi32>
    %95 = vector.broadcast %94 : vector<1x128xi32> to vector<128x128xi32>
    %96 = arith.cmpi eq, %88, %95 : vector<128x128xi32>
    %97 = arith.extui %96 : vector<128x128xi1> to vector<128x128xi32>
    %98 = arith.sitofp %97 : vector<128x128xi32> to vector<128x128xf32>
    %cst_14 = arith.constant dense<0.000000e+00> : vector<4x128xf32>
    %99 = tpu.matmul %93, %98, %cst_14 {dimension_numbers = #tpu.dot_dimension_numbers<[1], [1], [0], [0], [0, 0, 1, 0], [], []>} : vector<4x128xf32>, vector<128x128xf32>, vector<4x128xf32> -> vector<4x128xf32>
    %100 = vector.extract_strided_slice %73 {offsets = [1, 0], sizes = [1, 128], strides = [1, 1]} : vector<8x128xf32> to vector<1x128xf32>
    %101 = vector.extract_strided_slice %74 {offsets = [1, 0], sizes = [1, 128], strides = [1, 1]} : vector<8x128xf32> to vector<1x128xf32>
    %102 = vector.extract_strided_slice %75 {offsets = [1, 0], sizes = [1, 128], strides = [1, 1]} : vector<8x128xf32> to vector<1x128xf32>
    %103 = vector.extract_strided_slice %72 {offsets = [1, 0], sizes = [1, 128], strides = [1, 1]} : vector<8x128xf32> to vector<1x128xf32>
    %104 = tpu.concatenate %100, %101, %102, %103 in 0 : vector<1x128xf32>, vector<1x128xf32>, vector<1x128xf32>, vector<1x128xf32> -> vector<4x128xf32>
    %105 = vector.extract_strided_slice %87 {offsets = [1, 0], sizes = [1, 128], strides = [1, 1]} : vector<8x128xi32> to vector<1x128xi32>
    %106 = vector.broadcast %105 : vector<1x128xi32> to vector<128x128xi32>
    %107 = arith.cmpi eq, %88, %106 : vector<128x128xi32>
    %108 = arith.extui %107 : vector<128x128xi1> to vector<128x128xi32>
    %109 = arith.sitofp %108 : vector<128x128xi32> to vector<128x128xf32>
    %cst_15 = arith.constant dense<0.000000e+00> : vector<4x128xf32>
    %110 = tpu.matmul %104, %109, %cst_15 {dimension_numbers = #tpu.dot_dimension_numbers<[1], [1], [0], [0], [0, 0, 1, 0], [], []>} : vector<4x128xf32>, vector<128x128xf32>, vector<4x128xf32> -> vector<4x128xf32>
    %111 = arith.addf %99, %110 : vector<4x128xf32>
    %112 = vector.extract_strided_slice %73 {offsets = [2, 0], sizes = [1, 128], strides = [1, 1]} : vector<8x128xf32> to vector<1x128xf32>
    %113 = vector.extract_strided_slice %74 {offsets = [2, 0], sizes = [1, 128], strides = [1, 1]} : vector<8x128xf32> to vector<1x128xf32>
    %114 = vector.extract_strided_slice %75 {offsets = [2, 0], sizes = [1, 128], strides = [1, 1]} : vector<8x128xf32> to vector<1x128xf32>
    %115 = vector.extract_strided_slice %72 {offsets = [2, 0], sizes = [1, 128], strides = [1, 1]} : vector<8x128xf32> to vector<1x128xf32>
    %116 = tpu.concatenate %112, %113, %114, %115 in 0 : vector<1x128xf32>, vector<1x128xf32>, vector<1x128xf32>, vector<1x128xf32> -> vector<4x128xf32>
    %117 = vector.extract_strided_slice %87 {offsets = [2, 0], sizes = [1, 128], strides = [1, 1]} : vector<8x128xi32> to vector<1x128xi32>
    %118 = vector.broadcast %117 : vector<1x128xi32> to vector<128x128xi32>
    %119 = arith.cmpi eq, %88, %118 : vector<128x128xi32>
    %120 = arith.extui %119 : vector<128x128xi1> to vector<128x128xi32>
    %121 = arith.sitofp %120 : vector<128x128xi32> to vector<128x128xf32>
    %cst_16 = arith.constant dense<0.000000e+00> : vector<4x128xf32>
    %122 = tpu.matmul %116, %121, %cst_16 {dimension_numbers = #tpu.dot_dimension_numbers<[1], [1], [0], [0], [0, 0, 1, 0], [], []>} : vector<4x128xf32>, vector<128x128xf32>, vector<4x128xf32> -> vector<4x128xf32>
    %123 = arith.addf %111, %122 : vector<4x128xf32>
    %124 = vector.extract_strided_slice %73 {offsets = [3, 0], sizes = [1, 128], strides = [1, 1]} : vector<8x128xf32> to vector<1x128xf32>
    %125 = vector.extract_strided_slice %74 {offsets = [3, 0], sizes = [1, 128], strides = [1, 1]} : vector<8x128xf32> to vector<1x128xf32>
    %126 = vector.extract_strided_slice %75 {offsets = [3, 0], sizes = [1, 128], strides = [1, 1]} : vector<8x128xf32> to vector<1x128xf32>
    %127 = vector.extract_strided_slice %72 {offsets = [3, 0], sizes = [1, 128], strides = [1, 1]} : vector<8x128xf32> to vector<1x128xf32>
    %128 = tpu.concatenate %124, %125, %126, %127 in 0 : vector<1x128xf32>, vector<1x128xf32>, vector<1x128xf32>, vector<1x128xf32> -> vector<4x128xf32>
    %129 = vector.extract_strided_slice %87 {offsets = [3, 0], sizes = [1, 128], strides = [1, 1]} : vector<8x128xi32> to vector<1x128xi32>
    %130 = vector.broadcast %129 : vector<1x128xi32> to vector<128x128xi32>
    %131 = arith.cmpi eq, %88, %130 : vector<128x128xi32>
    %132 = arith.extui %131 : vector<128x128xi1> to vector<128x128xi32>
    %133 = arith.sitofp %132 : vector<128x128xi32> to vector<128x128xf32>
    %cst_17 = arith.constant dense<0.000000e+00> : vector<4x128xf32>
    %134 = tpu.matmul %128, %133, %cst_17 {dimension_numbers = #tpu.dot_dimension_numbers<[1], [1], [0], [0], [0, 0, 1, 0], [], []>} : vector<4x128xf32>, vector<128x128xf32>, vector<4x128xf32> -> vector<4x128xf32>
    %135 = arith.addf %123, %134 : vector<4x128xf32>
    %136 = vector.extract_strided_slice %73 {offsets = [4, 0], sizes = [1, 128], strides = [1, 1]} : vector<8x128xf32> to vector<1x128xf32>
    %137 = vector.extract_strided_slice %74 {offsets = [4, 0], sizes = [1, 128], strides = [1, 1]} : vector<8x128xf32> to vector<1x128xf32>
    %138 = vector.extract_strided_slice %75 {offsets = [4, 0], sizes = [1, 128], strides = [1, 1]} : vector<8x128xf32> to vector<1x128xf32>
    %139 = vector.extract_strided_slice %72 {offsets = [4, 0], sizes = [1, 128], strides = [1, 1]} : vector<8x128xf32> to vector<1x128xf32>
    %140 = tpu.concatenate %136, %137, %138, %139 in 0 : vector<1x128xf32>, vector<1x128xf32>, vector<1x128xf32>, vector<1x128xf32> -> vector<4x128xf32>
    %141 = vector.extract_strided_slice %87 {offsets = [4, 0], sizes = [1, 128], strides = [1, 1]} : vector<8x128xi32> to vector<1x128xi32>
    %142 = vector.broadcast %141 : vector<1x128xi32> to vector<128x128xi32>
    %143 = arith.cmpi eq, %88, %142 : vector<128x128xi32>
    %144 = arith.extui %143 : vector<128x128xi1> to vector<128x128xi32>
    %145 = arith.sitofp %144 : vector<128x128xi32> to vector<128x128xf32>
    %cst_18 = arith.constant dense<0.000000e+00> : vector<4x128xf32>
    %146 = tpu.matmul %140, %145, %cst_18 {dimension_numbers = #tpu.dot_dimension_numbers<[1], [1], [0], [0], [0, 0, 1, 0], [], []>} : vector<4x128xf32>, vector<128x128xf32>, vector<4x128xf32> -> vector<4x128xf32>
    %147 = arith.addf %135, %146 : vector<4x128xf32>
    %148 = vector.extract_strided_slice %73 {offsets = [5, 0], sizes = [1, 128], strides = [1, 1]} : vector<8x128xf32> to vector<1x128xf32>
    %149 = vector.extract_strided_slice %74 {offsets = [5, 0], sizes = [1, 128], strides = [1, 1]} : vector<8x128xf32> to vector<1x128xf32>
    %150 = vector.extract_strided_slice %75 {offsets = [5, 0], sizes = [1, 128], strides = [1, 1]} : vector<8x128xf32> to vector<1x128xf32>
    %151 = vector.extract_strided_slice %72 {offsets = [5, 0], sizes = [1, 128], strides = [1, 1]} : vector<8x128xf32> to vector<1x128xf32>
    %152 = tpu.concatenate %148, %149, %150, %151 in 0 : vector<1x128xf32>, vector<1x128xf32>, vector<1x128xf32>, vector<1x128xf32> -> vector<4x128xf32>
    %153 = vector.extract_strided_slice %87 {offsets = [5, 0], sizes = [1, 128], strides = [1, 1]} : vector<8x128xi32> to vector<1x128xi32>
    %154 = vector.broadcast %153 : vector<1x128xi32> to vector<128x128xi32>
    %155 = arith.cmpi eq, %88, %154 : vector<128x128xi32>
    %156 = arith.extui %155 : vector<128x128xi1> to vector<128x128xi32>
    %157 = arith.sitofp %156 : vector<128x128xi32> to vector<128x128xf32>
    %cst_19 = arith.constant dense<0.000000e+00> : vector<4x128xf32>
    %158 = tpu.matmul %152, %157, %cst_19 {dimension_numbers = #tpu.dot_dimension_numbers<[1], [1], [0], [0], [0, 0, 1, 0], [], []>} : vector<4x128xf32>, vector<128x128xf32>, vector<4x128xf32> -> vector<4x128xf32>
    %159 = arith.addf %147, %158 : vector<4x128xf32>
    %160 = vector.extract_strided_slice %73 {offsets = [6, 0], sizes = [1, 128], strides = [1, 1]} : vector<8x128xf32> to vector<1x128xf32>
    %161 = vector.extract_strided_slice %74 {offsets = [6, 0], sizes = [1, 128], strides = [1, 1]} : vector<8x128xf32> to vector<1x128xf32>
    %162 = vector.extract_strided_slice %75 {offsets = [6, 0], sizes = [1, 128], strides = [1, 1]} : vector<8x128xf32> to vector<1x128xf32>
    %163 = vector.extract_strided_slice %72 {offsets = [6, 0], sizes = [1, 128], strides = [1, 1]} : vector<8x128xf32> to vector<1x128xf32>
    %164 = tpu.concatenate %160, %161, %162, %163 in 0 : vector<1x128xf32>, vector<1x128xf32>, vector<1x128xf32>, vector<1x128xf32> -> vector<4x128xf32>
    %165 = vector.extract_strided_slice %87 {offsets = [6, 0], sizes = [1, 128], strides = [1, 1]} : vector<8x128xi32> to vector<1x128xi32>
    %166 = vector.broadcast %165 : vector<1x128xi32> to vector<128x128xi32>
    %167 = arith.cmpi eq, %88, %166 : vector<128x128xi32>
    %168 = arith.extui %167 : vector<128x128xi1> to vector<128x128xi32>
    %169 = arith.sitofp %168 : vector<128x128xi32> to vector<128x128xf32>
    %cst_20 = arith.constant dense<0.000000e+00> : vector<4x128xf32>
    %170 = tpu.matmul %164, %169, %cst_20 {dimension_numbers = #tpu.dot_dimension_numbers<[1], [1], [0], [0], [0, 0, 1, 0], [], []>} : vector<4x128xf32>, vector<128x128xf32>, vector<4x128xf32> -> vector<4x128xf32>
    %171 = arith.addf %159, %170 : vector<4x128xf32>
    %172 = vector.extract_strided_slice %73 {offsets = [7, 0], sizes = [1, 128], strides = [1, 1]} : vector<8x128xf32> to vector<1x128xf32>
    %173 = vector.extract_strided_slice %74 {offsets = [7, 0], sizes = [1, 128], strides = [1, 1]} : vector<8x128xf32> to vector<1x128xf32>
    %174 = vector.extract_strided_slice %75 {offsets = [7, 0], sizes = [1, 128], strides = [1, 1]} : vector<8x128xf32> to vector<1x128xf32>
    %175 = vector.extract_strided_slice %72 {offsets = [7, 0], sizes = [1, 128], strides = [1, 1]} : vector<8x128xf32> to vector<1x128xf32>
    %176 = tpu.concatenate %172, %173, %174, %175 in 0 : vector<1x128xf32>, vector<1x128xf32>, vector<1x128xf32>, vector<1x128xf32> -> vector<4x128xf32>
    %177 = vector.extract_strided_slice %87 {offsets = [7, 0], sizes = [1, 128], strides = [1, 1]} : vector<8x128xi32> to vector<1x128xi32>
    %178 = vector.broadcast %177 : vector<1x128xi32> to vector<128x128xi32>
    %179 = arith.cmpi eq, %88, %178 : vector<128x128xi32>
    %180 = arith.extui %179 : vector<128x128xi1> to vector<128x128xi32>
    %181 = arith.sitofp %180 : vector<128x128xi32> to vector<128x128xf32>
    %cst_21 = arith.constant dense<0.000000e+00> : vector<4x128xf32>
    %182 = tpu.matmul %176, %181, %cst_21 {dimension_numbers = #tpu.dot_dimension_numbers<[1], [1], [0], [0], [0, 0, 1, 0], [], []>} : vector<4x128xf32>, vector<128x128xf32>, vector<4x128xf32> -> vector<4x128xf32>
    %183 = arith.addf %171, %182 : vector<4x128xf32>
    %c0_22 = arith.constant 0 : index
    %c0_23 = arith.constant 0 : index
    %184 = vector.load %arg7[%c0_22, %c0_23] : memref<4x128xf32, #tpu.memory_space<vmem>>, vector<4x128xf32>
    %185 = arith.addf %184, %183 : vector<4x128xf32>
    %c0_24 = arith.constant 0 : index
    %c0_25 = arith.constant 0 : index
    %186 = vector.load %arg7[%c0_24, %c0_25] : memref<4x128xf32, #tpu.memory_space<vmem>>, vector<4x128xf32>
    tpu.vector_store %arg7[%c0_24, %c0_25], %185 {strides = array<i32>} : memref<4x128xf32, #tpu.memory_space<vmem>>, vector<4x128xf32>,
    %c0_i32_26 = arith.constant 0 : i32
    %187 = arith.cmpi eq, %arg2, %c0_i32_26 : i32
    %188 = arith.extui %187 : i1 to i32
    %c0_i32_27 = arith.constant 0 : i32
    %189 = arith.cmpi ne, %188, %c0_i32_27 : i32
    scf.if %189 {
      %c0_28 = arith.constant 0 : index
      %c0_29 = arith.constant 0 : index
      %190 = vector.load %arg7[%c0_28, %c0_29] : memref<4x128xf32, #tpu.memory_space<vmem>>, vector<4x128xf32>
      %191 = vector.extract_strided_slice %190 {offsets = [3, 0], sizes = [1, 128], strides = [1, 1]} : vector<4x128xf32> to vector<1x128xf32>
      %c0_30 = arith.constant 0 : index
      %c0_31 = arith.constant 0 : index
      %192 = vector.load %arg4[%c0_30, %c0_31] : memref<8x3xf32, #tpu.memory_space<vmem>>, vector<8x3xf32>
      %193 = vector.extract_strided_slice %192 {offsets = [0, 0], sizes = [8, 1], strides = [1, 1]} : vector<8x3xf32> to vector<8x1xf32>
      %194 = vector.extract_strided_slice %190 {offsets = [0, 0], sizes = [1, 128], strides = [1, 1]} : vector<4x128xf32> to vector<1x128xf32>
      %195 = vector.broadcast %193 : vector<8x1xf32> to vector<8x128xf32>
      %196 = vector.broadcast %194 : vector<1x128xf32> to vector<8x128xf32>
      %197 = arith.mulf %195, %196 : vector<8x128xf32>
      %198 = vector.extract_strided_slice %192 {offsets = [0, 1], sizes = [8, 1], strides = [1, 1]} : vector<8x3xf32> to vector<8x1xf32>
      %199 = vector.extract_strided_slice %190 {offsets = [1, 0], sizes = [1, 128], strides = [1, 1]} : vector<4x128xf32> to vector<1x128xf32>
      %200 = vector.broadcast %198 : vector<8x1xf32> to vector<8x128xf32>
      %201 = vector.broadcast %199 : vector<1x128xf32> to vector<8x128xf32>
      %202 = arith.mulf %200, %201 : vector<8x128xf32>
      %203 = arith.addf %197, %202 : vector<8x128xf32>
      %204 = vector.extract_strided_slice %192 {offsets = [0, 2], sizes = [8, 1], strides = [1, 1]} : vector<8x3xf32> to vector<8x1xf32>
      %205 = vector.extract_strided_slice %190 {offsets = [2, 0], sizes = [1, 128], strides = [1, 1]} : vector<4x128xf32> to vector<1x128xf32>
      %206 = vector.broadcast %204 : vector<8x1xf32> to vector<8x128xf32>
      %207 = vector.broadcast %205 : vector<1x128xf32> to vector<8x128xf32>
      %208 = arith.mulf %206, %207 : vector<8x128xf32>
      %209 = arith.addf %203, %208 : vector<8x128xf32>
      %c0_32 = arith.constant 0 : index
      %c0_33 = arith.constant 0 : index
      %210 = vector.load %arg5[%c0_32, %c0_33] : memref<8x1xf32, #tpu.memory_space<vmem>>, vector<8x1xf32>
      %211 = vector.broadcast %210 : vector<8x1xf32> to vector<8x128xf32>
      %212 = vector.broadcast %191 : vector<1x128xf32> to vector<8x128xf32>
      %213 = arith.mulf %211, %212 : vector<8x128xf32>
      %214 = arith.addf %209, %213 : vector<8x128xf32>
      %cst_34 = arith.constant 1.000000e+00 : f32
      %215 = vector.broadcast %cst_34 : f32 to vector<1x128xf32>
      %216 = arith.maximumf %191, %215 : vector<1x128xf32>
      %217 = vector.broadcast %216 : vector<1x128xf32> to vector<8x128xf32>
      %218 = arith.divf %214, %217 : vector<8x128xf32>
      %c0_35 = arith.constant 0 : index
      %c0_36 = arith.constant 0 : index
      %c0_37 = arith.constant 0 : index
      %219 = vector.load %arg6[%c0_35, %c0_36, %c0_37] : memref<1x8x128xf32, #tpu.memory_space<vmem>>, vector<1x8x128xf32>
      %220 = vector.shape_cast %219 : vector<1x8x128xf32> to vector<8x128xf32>
      %221 = vector.shape_cast %218 : vector<8x128xf32> to vector<1x8x128xf32>
      tpu.vector_store %arg6[%c0_35, %c0_36, %c0_37], %221 {strides = array<i32>} : memref<1x8x128xf32, #tpu.memory_space<vmem>>, vector<1x8x128xf32>,
    } else {
    }
    return
  }
  func.func @transform_0(%arg0: i32, %arg1: i32, %arg2: i32) -> (i32, i32, i32) {
    %c0_i32 = arith.constant 0 : i32
    %c0_i32_0 = arith.constant 0 : i32
    return %arg0, %c0_i32, %arg2 : i32, i32, i32
  }
  func.func @transform_1(%arg0: i32, %arg1: i32, %arg2: i32) -> (i32, i32) {
    %c0_i32 = arith.constant 0 : i32
    %c0_i32_0 = arith.constant 0 : i32
    %c0_i32_1 = arith.constant 0 : i32
    return %c0_i32, %c0_i32_0 : i32, i32
  }
  func.func @transform_2(%arg0: i32, %arg1: i32, %arg2: i32) -> (i32, i32) {
    %c0_i32 = arith.constant 0 : i32
    %c0_i32_0 = arith.constant 0 : i32
    %c0_i32_1 = arith.constant 0 : i32
    return %c0_i32, %c0_i32_0 : i32, i32
  }
  func.func @transform_3(%arg0: i32, %arg1: i32, %arg2: i32) -> (i32, i32, i32) {
    %c0_i32 = arith.constant 0 : i32
    %c0_i32_0 = arith.constant 0 : i32
    return %arg0, %c0_i32, %arg1 : i32, i32, i32
  }
}

</mosaic_0001>

<llo_original>
// kernel: tpu_custom_call.1
$region0: #{tpu_custom_call.1}
  #allocation0 [shape = 'u32[]', space=smem, size = 0x4, offset = 0x4, fixed_abs, tag = 'smem constant byte address 0x4 - core index']
  #allocation1 [shape = 'u32[144,128]{1,0:T(1,128)}', space=vmem, size = 0x12000, scoped, tag = 'internal scratch']
  #allocation2 [shape = 'f32[4,128]{1,0:T(4,128)}', space=vmem, size = 0x800, scoped, tag = 'scratch operand']
  %s0 = inlined_call_operand.vmem [shape: f32[2,3,128], index: 0, kind: input, shape index: {}]
  %s1 = inlined_call_operand.vmem [shape: f32[8,3], index: 1, kind: input, shape index: {}]
  %s2 = inlined_call_operand.vmem [shape: f32[8,1], index: 2, kind: input, shape index: {}]
  %s3 = inlined_call_operand.hbm [shape: f32[2,8,128], index: 3, kind: output, shape index: {}]
  %s4 = sld [smem:[#allocation0]]
  $region53: #{tpu_custom_call.1} parent=0
    _
  %s6 = ssub.s32 1, %s4
  %s7 = scalar_select 0, %s6, %s4
  $region1: #{tpu_custom_call.1} parent=0
    #allocation3 [shape = 'u8[8192]{0}', space=vmem, size = 0x2000, scoped, tag = 'output window, operand 0']
    #allocation4 [shape = 's32[2]{0}', space=sflag, size = 0x8, scoped, tag = 'scoped memory for tpu_custom_call.1']
    %8 = vsyncpa [#allocation4], 0
    %s9 = scalar_lea.sflag [#allocation4], 1
    %10 = vsyncpa %s9, 0
    loop: start=0, step=1, limit=4
    $region2: #{tpu_custom_call.1} parent=1 // loop_pre_header
      _
    $region3: #{tpu_custom_call.1} parent=1 // loop_header
      %s12 = sphi 0, %s16
      %p13 = scmp.ge.s32.totalorder %s12, 4
      %s19 = sphi 0, %s38
      %s20 = sphi 0, %s34
      %s21 = sphi 0, %s30
      %s22 = sphi 0, %s19
      %s23 = sphi 0, %s20
      %s24 = sphi 0, %s21
      %s25 = sphi 0, %s22
      %s26 = sphi 0, %s23
      %s27 = sphi 0, %s24
      %s43 = sphi 0, %s45
      %s46 = sphi 0, %s43
      %s47 = sphi 0, %s46
      %s63 = sphi 0, %s47
      %s67 = sphi 0, %s67
      %s69 = sphi 0, %s67
      %s70 = sphi 0, %s69
      %s84 = sphi 0, %s70
      %s88 = sphi 0, %s88
      %s90 = sphi 0, %s88
      %s91 = sphi 0, %s90
      %s105 = sphi 0, %s91
      %s113 = sphi 0, %s115
      %s116 = sphi 0, %s113
      %s117 = sphi 0, %s116
      %s133 = sphi 0, %s117
    $region4: #{tpu_custom_call.1} parent=1 // loop_header_branch
      %15 = sbr.rel (%p13) target = $region8
    $region5: #{tpu_custom_call.1} parent=1 // loop_body
      %s17 = ssub.s32 %s12, 1
      %s18 = ssub.s32 %s12, 2
      %s28 = sadd.s32 1, %s21
      %p29 = scmp.ge.s32.totalorder %s28, 1
      %s30 = scalar_select %p29, 0, %s28
      %s31 = sadd.s32 1, %s20
      %s32 = scalar_select %p29, %s31, %s20
      %p33 = scmp.ge.s32.totalorder %s32, 1
      %s34 = scalar_select %p33, 0, %s32
      %s35 = sadd.s32 1, %s19
      %s36 = scalar_select %p33, %s35, %s19
      %p37 = scmp.ge.s32.totalorder %s36, 2
      %s38 = scalar_select %p37, 0, %s36
      %s39 = ssub.s32 %s19, %s38
      %s40 = ssub.s32 %s21, %s30
      %s41 = sor.u32 %s39, %s40
      %p42 = scmp.eq.s32.totalorder %s41, 0
      %s44 = sadd.s32 %s43, 1
      %s45 = scalar_select %p42, %s43, %s44
      %p48 = pneg %p42
      %p49 = scmp.eq.s32.totalorder %s12, 1
      %p50 = por %p48, %p49
      %p51 = scmp.ne.s32.totalorder %s43, %s46
      %p52 = scmp.eq.s32.totalorder %s12, 0
      %p53 = por %p51, %p52
      %p54 = scmp.ne.s32.totalorder %s43, %s46
      %p55 = scmp.eq.s32.totalorder %s17, 1
      %p56 = por %p54, %p55
      %p57 = scmp.ne.s32.totalorder %s46, %s47
      %p58 = scmp.eq.s32.totalorder %s17, 0
      %p59 = por %p57, %p58
      %p60 = scmp.ne.s32.totalorder %s46, %s47
      %p61 = scmp.eq.s32.totalorder %s18, 1
      %p62 = por %p60, %p61
      %p64 = scmp.ne.s32.totalorder %s47, %s63
      %p65 = scmp.eq.s32.totalorder %s18, 0
      %p66 = por %p64, %p65
      %s68 = sadd.s32 %s67, 1
      %p71 = scmp.eq.s32.totalorder %s12, 1
      %p72 = scmp.ne.s32.totalorder %s67, %s69
      %p73 = scmp.eq.s32.totalorder %s12, 0
      %p74 = por %p72, %p73
      %p75 = scmp.ne.s32.totalorder %s67, %s69
      %p76 = scmp.eq.s32.totalorder %s17, 1
      %p77 = por %p75, %p76
      %p78 = scmp.ne.s32.totalorder %s69, %s70
      %p79 = scmp.eq.s32.totalorder %s17, 0
      %p80 = por %p78, %p79
      %p81 = scmp.ne.s32.totalorder %s69, %s70
      %p82 = scmp.eq.s32.totalorder %s18, 1
      %p83 = por %p81, %p82
      %p85 = scmp.ne.s32.totalorder %s70, %s84
      %p86 = scmp.eq.s32.totalorder %s18, 0
      %p87 = por %p85, %p86
      %s89 = sadd.s32 %s88, 1
      %p92 = scmp.eq.s32.totalorder %s12, 1
      %p93 = scmp.ne.s32.totalorder %s88, %s90
      %p94 = scmp.eq.s32.totalorder %s12, 0
      %p95 = por %p93, %p94
      %p96 = scmp.ne.s32.totalorder %s88, %s90
      %p97 = scmp.eq.s32.totalorder %s17, 1
      %p98 = por %p96, %p97
      %p99 = scmp.ne.s32.totalorder %s90, %s91
      %p100 = scmp.eq.s32.totalorder %s17, 0
      %p101 = por %p99, %p100
      %p102 = scmp.ne.s32.totalorder %s90, %s91
      %p103 = scmp.eq.s32.totalorder %s18, 1
      %p104 = por %p102, %p103
      %p106 = scmp.ne.s32.totalorder %s91, %s105
      %p107 = scmp.eq.s32.totalorder %s18, 0
      %p108 = por %p106, %p107
      %s109 = ssub.s32 %s19, %s38
      %s110 = ssub.s32 %s20, %s34
      %s111 = sor.u32 %s109, %s110
      %p112 = scmp.eq.s32.totalorder %s111, 0
      %s114 = sadd.s32 %s113, 1
      %s115 = scalar_select %p112, %s113, %s114
      %p118 = pneg %p112
      %p119 = scmp.eq.s32.totalorder %s12, 1
      %p120 = por %p118, %p119
      %p121 = scmp.ne.s32.totalorder %s113, %s116
      %p122 = scmp.eq.s32.totalorder %s12, 0
      %p123 = por %p121, %p122
      %p124 = scmp.ne.s32.totalorder %s113, %s116
      %p125 = scmp.eq.s32.totalorder %s17, 1
      %p126 = por %p124, %p125
      %p127 = scmp.ne.s32.totalorder %s116, %s117
      %p128 = scmp.eq.s32.totalorder %s17, 0
      %p129 = por %p127, %p128
      %p130 = scmp.ne.s32.totalorder %s116, %s117
      %p131 = scmp.eq.s32.totalorder %s18, 1
      %p132 = por %p130, %p131
      %p134 = scmp.ne.s32.totalorder %s117, %s133
      %p135 = scmp.eq.s32.totalorder %s18, 0
      %p136 = por %p134, %p135
      %p137 = scmp.le.s32.totalorder 1, %s12
      %p138 = scmp.lt.s32.totalorder %s12, 3
      %p139 = pnand %p137, %p138
      %p140 = pneg %p139
      // Predicated region
      $region9: #{tpu_custom_call.1} parent=5 // pred_check
        _
      $region10: #{tpu_custom_call.1} parent=5 // pred_check_branch
        %142 = sbr.rel (%p139) target = $region12
      $region11: #{tpu_custom_call.1} parent=5 // pred_region
        %s143 = ssub.s32 %s12, 1
        // Predicated region
        $region13: #{tpu_custom_call.1} parent=11 // pred_check
          %p144 = pneg %p80
        $region14: #{tpu_custom_call.1} parent=11 // pred_check_branch
          %146 = sbr.rel (%p144) target = $region16
        $region15: #{tpu_custom_call.1} parent=11 // pred_region
          _
        $region16: #{tpu_custom_call.1} parent=11 // pred_fallthru
          _
        // Predicated region
        $region17: #{tpu_custom_call.1} parent=11 // pred_check
          %p147 = pneg %p101
        $region18: #{tpu_custom_call.1} parent=11 // pred_check_branch
          %149 = sbr.rel (%p147) target = $region20
        $region19: #{tpu_custom_call.1} parent=11 // pred_region
          _
        $region20: #{tpu_custom_call.1} parent=11 // pred_fallthru
          _
      $region12: #{tpu_custom_call.1} parent=5 // pred_fallthru
        _
      %p150 = scmp.lt.s32.totalorder %s12, 2
      // Predicated region
      $region21: #{tpu_custom_call.1} parent=5 // pred_check
        %p151 = pneg %p150
      $region22: #{tpu_custom_call.1} parent=5 // pred_check_branch
        %153 = sbr.rel (%p151) target = $region24
      $region23: #{tpu_custom_call.1} parent=5 // pred_region
        // Predicated region
        $region25: #{tpu_custom_call.1} parent=23 // pred_check
          %p154 = pneg %p53
        $region26: #{tpu_custom_call.1} parent=23 // pred_check_branch
          %156 = sbr.rel (%p154) target = $region28
        $region27: #{tpu_custom_call.1} parent=23 // pred_region
          %p157 = scmp.lt.s32.totalorder %s19, 1
          %s158 = scalar_select %p157, %s19, 1
          %p159 = scmp.lt.s32.totalorder %s21, 0
          %s160 = scalar_select %p159, %s21, 0
          %s161 = sadd.s32 %s160, %s158
          %s162 = smul.addr %s161, 4
          %s163 = scalar_lea.vmem %s0, %s162
        $region28: #{tpu_custom_call.1} parent=23 // pred_fallthru
          _
      $region24: #{tpu_custom_call.1} parent=5 // pred_fallthru
        _
      %p164 = scmp.le.s32.totalorder 1, %s12
      %p165 = scmp.lt.s32.totalorder %s12, 3
      %p166 = pnand %p164, %p165
      %p167 = pneg %p166
      // Predicated region
      $region29: #{tpu_custom_call.1} parent=5 // pred_check
        _
      $region30: #{tpu_custom_call.1} parent=5 // pred_check_branch
        %169 = sbr.rel (%p166) target = $region32
      $region31: #{tpu_custom_call.1} parent=5 // pred_region
        %s170 = ssub.s32 %s12, 1
        %p171 = scmp.lt.s32.totalorder %s22, 1
        %s172 = scalar_select %p171, %s22, 1
        %p173 = scmp.lt.s32.totalorder %s24, 0
        %s174 = scalar_select %p173, %s24, 0
        %s175 = sadd.s32 %s174, %s172
        %s176 = smul.addr %s175, 4
        %s177 = scalar_lea.vmem %s0, %s176
        %p178 = pneg %p59
        %p179 = pneg %p56
        %p180 = pneg %p80
        %p181 = pneg %p77
        %p182 = pneg %p101
        %p183 = pneg %p98
        %p184 = pneg %p129
        %p185 = pneg %p126
        %s186 = sand.u32 %s116, 1
        %s187 = scalar_lea.sflag [#allocation4], %s186
        %s188 = sand.u32 %s116, 1
        %s189 = smul.addr %s188, 8
        %s190 = scalar_lea.vmem [#allocation3], %s189
        %p191 = scmp.lt.s32.totalorder %s22, 1
        %s192 = scalar_select %p191, %s22, 1
        %p193 = scmp.lt.s32.totalorder %s24, 0
        %s194 = scalar_select %p193, %s24, 0
        %s195 = sadd.s32 %s194, %s192
        %s196 = smul.addr %s195, 4
        %s197 = scalar_lea.vmem %s0, %s196
        %p198 = scmp.eq.s32.totalorder %s24, 0
        // Predicated region
        $region33: #{tpu_custom_call.1} parent=31 // pred_check
          %p199 = pneg %p198
        $region34: #{tpu_custom_call.1} parent=31 // pred_check_branch
          %201 = sbr.rel (%p199) target = $region36
        $region35: #{tpu_custom_call.1} parent=31 // pred_region
          %202 = vst [vmem:[#allocation2] sm:$0xf] 0.0
        $region36: #{tpu_custom_call.1} parent=31 // pred_fallthru
          _
        %v203 = vld [vmem:[%s197] sm:$0x7]
        %v204 = vadd.f32 %v203, 0.5
        %v205 = vmul.f32 %v204, 4.0
        %v206 = vsub.f32 %v205, 0.5
        %v207 = vfloor.f32 %v206
        %v208 = vmax.f32 %v207, 0.0
        %v209 = vmin.f32 %v208, 3.0
        %v210 = vceil.f32 %v206
        %v211 = vmax.f32 %v210, 0.0
        %v212 = vmin.f32 %v211, 3.0
        %v213 = vlaneseq
        %v214 = vshrl.u32 %v213, 7
        %v215 = vand.u32 %v214, 4
        %vm216 = vcmp.ne.s32.totalorder %v215, 0
        %v217 = vand.u32 %v214, 2
        %vm218 = vcmp.ne.s32.totalorder %v217, 0
        %v219 = vand.u32 %v214, 1
        %vm220 = vcmp.ne.s32.totalorder %v219, 0
        %v221 = vlaneseq
        %v222 = vshrl.u32 %v221, 7
        %v223 = vsub.s32 0, %v222
        %v224 = vrot.slane %v212, %v223
        %v225 = vlaneseq
        %v226 = vshrl.u32 %v225, 7
        %v227 = vsub.s32 0, %v226
        %v228 = vrot.slane %v209, %v227
        %v229 = vsel %vm216, %v224, %v228
        %v230 = vlaneseq
        %v231 = vshrl.u32 %v230, 7
        %v232 = vsub.s32 1, %v231
        %v233 = vrot.slane %v212, %v232
        %v234 = vlaneseq
        %v235 = vshrl.u32 %v234, 7
        %v236 = vsub.s32 1, %v235
        %v237 = vrot.slane %v209, %v236
        %v238 = vsel %vm218, %v233, %v237
        %v239 = vlaneseq
        %v240 = vshrl.u32 %v239, 7
        %v241 = vsub.s32 2, %v240
        %v242 = vrot.slane %v212, %v241
        %v243 = vlaneseq
        %v244 = vshrl.u32 %v243, 7
        %v245 = vsub.s32 2, %v244
        %v246 = vrot.slane %v209, %v245
        %v247 = vsel %vm220, %v242, %v246
        %v248 = vlaneseq
        %v249 = vshrl.u32 %v248, 7
        %v250 = vsub.s32 0, %v249
        %v251 = vrot.slane %v206, %v250
        %v252 = vsub.f32 %v251, %v229
        %v253 = vlaneseq
        %v254 = vshrl.u32 %v253, 7
        %v255 = vsub.s32 1, %v254
        %v256 = vrot.slane %v206, %v255
        %v257 = vsub.f32 %v256, %v238
        %v258 = vlaneseq
        %v259 = vshrl.u32 %v258, 7
        %v260 = vsub.s32 2, %v259
        %v261 = vrot.slane %v206, %v260
        %v262 = vsub.f32 %v261, %v247
        %v263 = vmul.f32 %v252, %v252
        %v264 = vmul.f32 %v257, %v257
        %v265 = vadd.f32 %v263, %v264
        %v266 = vmul.f32 %v262, %v262
        %v267 = vadd.f32 %v265, %v266
        %vm268 = vcmp.lt.f32.partialorder %v267, 0.7569
        %v269 = vsel %vm268, 1, 0
        %v270 = vcvt.s32.f32 %v269
        %v271 = vmul.f32 %v252, %v270
        %v272 = vmul.f32 %v257, %v270
        %v273 = vmul.f32 %v262, %v270
        %v274 = vcvt.f32.s32.to.zero.pseudo %v229
        %v275 = vmul.u32 %v274, 16
        %v276 = vcvt.f32.s32.to.zero.pseudo %v238
        %v277 = vmul.u32 %v276, 4
        %v278 = vadd.s32 %v275, %v277
        %v279 = vcvt.f32.s32.to.zero.pseudo %v247
        %v280 = vadd.s32 %v278, %v279
        %s281 = smul.u32 %s23, 128
        %v282 = vstv %s281
        %v283 = vsub.s32 %v280, %v282
        %v284 = vadd.s32 %v214, 8
        %v285 = vadd.s32 %v214, 16
        %v286 = vadd.s32 %v214, 24
        %v287 = vadd.s32 %v214, 32
        %v288 = vadd.s32 %v214, 40
        %v289 = vadd.s32 %v214, 48
        %v290 = vadd.s32 %v214, 56
        %v291 = vadd.s32 %v214, 64
        %v292 = vadd.s32 %v214, 72
        %v293 = vadd.s32 %v214, 80
        %v294 = vadd.s32 %v214, 88
        %v295 = vadd.s32 %v214, 96
        %v296 = vadd.s32 %v214, 104
        %v297 = vadd.s32 %v214, 112
        %v298 = vadd.s32 %v214, 120
        %v300 = vrot.slane %v272, 7
        %v303 = vrot.slane %v273, 6
        %v306 = vrot.slane %v270, 5
        %vm308 = vcmask 1040384
        %v309 = vsel %vm308, %v271, %v300
        %vm310 = vcmask 1041408
        %v311 = vsel %vm310, %v309, %v303
        %vm312 = vcmask 1042432
        %v313 = vsel %vm312, %v311, %v306
        %v314 = vlaneseq
        %v315 = vshrl.u32 %v314, 7
        %v316 = vsub.s32 0, %v315
        %v317 = vrot.slane %v283, %v316
        %vm318 = vcmp.eq.s32.totalorder %v214, %v317
        %vm319 = vcmp.eq.s32.totalorder %v284, %v317
        %vm320 = vcmp.eq.s32.totalorder %v285, %v317
        %vm321 = vcmp.eq.s32.totalorder %v286, %v317
        %vm322 = vcmp.eq.s32.totalorder %v287, %v317
        %vm323 = vcmp.eq.s32.totalorder %v288, %v317
        %vm324 = vcmp.eq.s32.totalorder %v289, %v317
        %vm325 = vcmp.eq.s32.totalorder %v290, %v317
        %vm326 = vcmp.eq.s32.totalorder %v291, %v317
        %vm327 = vcmp.eq.s32.totalorder %v292, %v317
        %vm328 = vcmp.eq.s32.totalorder %v293, %v317
        %vm329 = vcmp.eq.s32.totalorder %v294, %v317
        %vm330 = vcmp.eq.s32.totalorder %v295, %v317
        %vm331 = vcmp.eq.s32.totalorder %v296, %v317
        %vm332 = vcmp.eq.s32.totalorder %v297, %v317
        %vm333 = vcmp.eq.s32.totalorder %v298, %v317
        %v334 = vsel %vm318, 1, 0
        %v335 = vsel %vm319, 1, 0
        %v336 = vsel %vm320, 1, 0
        %v337 = vsel %vm321, 1, 0
        %v338 = vsel %vm322, 1, 0
        %v339 = vsel %vm323, 1, 0
        %v340 = vsel %vm324, 1, 0
        %v341 = vsel %vm325, 1, 0
        %v342 = vsel %vm326, 1, 0
        %v343 = vsel %vm327, 1, 0
        %v344 = vsel %vm328, 1, 0
        %v345 = vsel %vm329, 1, 0
        %v346 = vsel %vm330, 1, 0
        %v347 = vsel %vm331, 1, 0
        %v348 = vsel %vm332, 1, 0
        %v349 = vsel %vm333, 1, 0
        %v350 = vcvt.s32.f32 %v334
        %v351 = vcvt.s32.f32 %v335
        %v352 = vcvt.s32.f32 %v336
        %v353 = vcvt.s32.f32 %v337
        %v354 = vcvt.s32.f32 %v338
        %v355 = vcvt.s32.f32 %v339
        %v356 = vcvt.s32.f32 %v340
        %v357 = vcvt.s32.f32 %v341
        %v358 = vcvt.s32.f32 %v342
        %v359 = vcvt.s32.f32 %v343
        %v360 = vcvt.s32.f32 %v344
        %v361 = vcvt.s32.f32 %v345
        %v362 = vcvt.s32.f32 %v346
        %v363 = vcvt.s32.f32 %v347
        %v364 = vcvt.s32.f32 %v348
        %v365 = vcvt.s32.f32 %v349
        %v367 = vrot.slane %v271, 1
        %v369 = vrot.slane %v273, 7
        %v371 = vrot.slane %v270, 6
        %v373 = vsel %vm308, %v367, %v272
        %v374 = vsel %vm310, %v373, %v369
        %v375 = vsel %vm312, %v374, %v371
        %v376 = vlaneseq
        %v377 = vshrl.u32 %v376, 7
        %v378 = vsub.s32 1, %v377
        %v379 = vrot.slane %v283, %v378
        %vm380 = vcmp.eq.s32.totalorder %v214, %v379
        %vm381 = vcmp.eq.s32.totalorder %v284, %v379
        %vm382 = vcmp.eq.s32.totalorder %v285, %v379
        %vm383 = vcmp.eq.s32.totalorder %v286, %v379
        %vm384 = vcmp.eq.s32.totalorder %v287, %v379
        %vm385 = vcmp.eq.s32.totalorder %v288, %v379
        %vm386 = vcmp.eq.s32.totalorder %v289, %v379
        %vm387 = vcmp.eq.s32.totalorder %v290, %v379
        %vm388 = vcmp.eq.s32.totalorder %v291, %v379
        %vm389 = vcmp.eq.s32.totalorder %v292, %v379
        %vm390 = vcmp.eq.s32.totalorder %v293, %v379
        %vm391 = vcmp.eq.s32.totalorder %v294, %v379
        %vm392 = vcmp.eq.s32.totalorder %v295, %v379
        %vm393 = vcmp.eq.s32.totalorder %v296, %v379
        %vm394 = vcmp.eq.s32.totalorder %v297, %v379
        %vm395 = vcmp.eq.s32.totalorder %v298, %v379
        %v396 = vsel %vm380, 1, 0
        %v397 = vsel %vm381, 1, 0
        %v398 = vsel %vm382, 1, 0
        %v399 = vsel %vm383, 1, 0
        %v400 = vsel %vm384, 1, 0
        %v401 = vsel %vm385, 1, 0
        %v402 = vsel %vm386, 1, 0
        %v403 = vsel %vm387, 1, 0
        %v404 = vsel %vm388, 1, 0
        %v405 = vsel %vm389, 1, 0
        %v406 = vsel %vm390, 1, 0
        %v407 = vsel %vm391, 1, 0
        %v408 = vsel %vm392, 1, 0
        %v409 = vsel %vm393, 1, 0
        %v410 = vsel %vm394, 1, 0
        %v411 = vsel %vm395, 1, 0
        %v412 = vcvt.s32.f32 %v396
        %v413 = vcvt.s32.f32 %v397
        %v414 = vcvt.s32.f32 %v398
        %v415 = vcvt.s32.f32 %v399
        %v416 = vcvt.s32.f32 %v400
        %v417 = vcvt.s32.f32 %v401
        %v418 = vcvt.s32.f32 %v402
        %v419 = vcvt.s32.f32 %v403
        %v420 = vcvt.s32.f32 %v404
        %v421 = vcvt.s32.f32 %v405
        %v422 = vcvt.s32.f32 %v406
        %v423 = vcvt.s32.f32 %v407
        %v424 = vcvt.s32.f32 %v408
        %v425 = vcvt.s32.f32 %v409
        %v426 = vcvt.s32.f32 %v410
        %v427 = vcvt.s32.f32 %v411
        %428 = vmatprep.subr.mxu0 0.0
        %429 = vmatpush1.xpose.msra.mxu0 %v427
        %430 = vmatprep.subr.mxu0 0.0
        %431 = vmatpush1.xpose.msra.mxu0 %v426
        %432 = vmatprep.subr.mxu0 0.0
        %433 = vmatpush1.xpose.msra.mxu0 %v425
        %434 = vmatprep.subr.mxu0 0.0
        %435 = vmatpush1.xpose.msra.mxu0 %v424
        %436 = vmatprep.subr.mxu0 0.0
        %437 = vmatpush1.xpose.msra.mxu0 %v423
        %438 = vmatprep.subr.mxu0 0.0
        %439 = vmatpush1.xpose.msra.mxu0 %v422
        %440 = vmatprep.subr.mxu0 0.0
        %441 = vmatpush1.xpose.msra.mxu0 %v421
        %442 = vmatprep.subr.mxu0 0.0
        %443 = vmatpush1.xpose.msra.mxu0 %v420
        %444 = vmatprep.subr.mxu0 0.0
        %445 = vmatpush1.xpose.msra.mxu0 %v419
        %446 = vmatprep.subr.mxu0 0.0
        %447 = vmatpush1.xpose.msra.mxu0 %v418
        %448 = vmatprep.subr.mxu0 0.0
        %449 = vmatpush1.xpose.msra.mxu0 %v417
        %450 = vmatprep.subr.mxu0 0.0
        %451 = vmatpush1.xpose.msra.mxu0 %v416
        %452 = vmatprep.subr.mxu0 0.0
        %453 = vmatpush1.xpose.msra.mxu0 %v415
        %454 = vmatprep.subr.mxu0 0.0
        %455 = vmatpush1.xpose.msra.mxu0 %v414
        %456 = vmatprep.subr.mxu0 0.0
        %457 = vmatpush1.xpose.msra.mxu0 %v413
        %458 = vmatprep.subr.mxu0 0.0
        %459 = vmatpush1.xpose.msra.mxu0 %v412
        %460 = vmatprep.subr.mxu0 0.0
        %461 = vmatpush2.xpose.msra.mxu0 0.0
        %462 = vmatprep.subr.mxu0 0.0
        %463 = vmatpush2.xpose.msra.mxu0 0.0
        %464 = vmatprep.subr.mxu0 0.0
        %465 = vmatpush2.xpose.msra.mxu0 0.0
        %466 = vmatprep.subr.mxu0 0.0
        %467 = vmatpush2.xpose.msra.mxu0 0.0
        %468 = vmatprep.subr.mxu0 0.0
        %469 = vmatpush2.xpose.msra.mxu0 0.0
        %470 = vmatprep.subr.mxu0 0.0
        %471 = vmatpush2.xpose.msra.mxu0 0.0
        %472 = vmatprep.subr.mxu0 0.0
        %473 = vmatpush2.xpose.msra.mxu0 0.0
        %474 = vmatprep.subr.mxu0 0.0
        %475 = vmatpush2.xpose.msra.mxu0 0.0
        %476 = vmatprep.subr.mxu0 0.0
        %477 = vmatpush2.xpose.msra.mxu0 0.0
        %478 = vmatprep.subr.mxu0 0.0
        %479 = vmatpush2.xpose.msra.mxu0 0.0
        %480 = vmatprep.subr.mxu0 0.0
        %481 = vmatpush2.xpose.msra.mxu0 0.0
        %482 = vmatprep.subr.mxu0 0.0
        %483 = vmatpush2.xpose.msra.mxu0 0.0
        %484 = vmatprep.subr.mxu0 0.0
        %485 = vmatpush2.xpose.msra.mxu0 0.0
        %486 = vmatprep.subr.mxu0 0.0
        %487 = vmatpush2.xpose.msra.mxu0 0.0
        %488 = vmatprep.subr.mxu0 0.0
        %489 = vmatpush2.xpose.msra.mxu0 0.0
        %490 = vmatprep.subr.mxu0 0.0
        %491 = vmatpush2.xpose.msra.mxu0 0.0
        %492 = vmatprep.mubr.f32.mxu0 0.0
        %493 = vmatmul.mubr.f32.gmra.mxu0 %v375
        %v494 = vpop.f32.mrf.mxu0
        %v495 = vadd.f32 0.0, %v494
        %v496 = vpop.f32.mrf.mxu0
        %497 = vdwg.mxu0
        %498 = vmatprep.subr.mxu0 0.0
        %499 = vmatpush1.xpose.msra.mxu0 %v365
        %500 = vmatprep.subr.mxu0 0.0
        %501 = vmatpush1.xpose.msra.mxu0 %v364
        %502 = vmatprep.subr.mxu0 0.0
        %503 = vmatpush1.xpose.msra.mxu0 %v363
        %504 = vmatprep.subr.mxu0 0.0
        %505 = vmatpush1.xpose.msra.mxu0 %v362
        %506 = vmatprep.subr.mxu0 0.0
        %507 = vmatpush1.xpose.msra.mxu0 %v361
        %508 = vmatprep.subr.mxu0 0.0
        %509 = vmatpush1.xpose.msra.mxu0 %v360
        %510 = vmatprep.subr.mxu0 0.0
        %511 = vmatpush1.xpose.msra.mxu0 %v359
        %512 = vmatprep.subr.mxu0 0.0
        %513 = vmatpush1.xpose.msra.mxu0 %v358
        %514 = vmatprep.subr.mxu0 0.0
        %515 = vmatpush1.xpose.msra.mxu0 %v357
        %516 = vmatprep.subr.mxu0 0.0
        %517 = vmatpush1.xpose.msra.mxu0 %v356
        %518 = vmatprep.subr.mxu0 0.0
        %519 = vmatpush1.xpose.msra.mxu0 %v355
        %520 = vmatprep.subr.mxu0 0.0
        %521 = vmatpush1.xpose.msra.mxu0 %v354
        %522 = vmatprep.subr.mxu0 0.0
        %523 = vmatpush1.xpose.msra.mxu0 %v353
        %524 = vmatprep.subr.mxu0 0.0
        %525 = vmatpush1.xpose.msra.mxu0 %v352
        %526 = vmatprep.subr.mxu0 0.0
        %527 = vmatpush1.xpose.msra.mxu0 %v351
        %528 = vmatprep.subr.mxu0 0.0
        %529 = vmatpush1.xpose.msra.mxu0 %v350
        %530 = vmatprep.subr.mxu0 0.0
        %531 = vmatpush2.xpose.msra.mxu0 0.0
        %532 = vmatprep.subr.mxu0 0.0
        %533 = vmatpush2.xpose.msra.mxu0 0.0
        %534 = vmatprep.subr.mxu0 0.0
        %535 = vmatpush2.xpose.msra.mxu0 0.0
        %536 = vmatprep.subr.mxu0 0.0
        %537 = vmatpush2.xpose.msra.mxu0 0.0
        %538 = vmatprep.subr.mxu0 0.0
        %539 = vmatpush2.xpose.msra.mxu0 0.0
        %540 = vmatprep.subr.mxu0 0.0
        %541 = vmatpush2.xpose.msra.mxu0 0.0
        %542 = vmatprep.subr.mxu0 0.0
        %543 = vmatpush2.xpose.msra.mxu0 0.0
        %544 = vmatprep.subr.mxu0 0.0
        %545 = vmatpush2.xpose.msra.mxu0 0.0
        %546 = vmatprep.subr.mxu0 0.0
        %547 = vmatpush2.xpose.msra.mxu0 0.0
        %548 = vmatprep.subr.mxu0 0.0
        %549 = vmatpush2.xpose.msra.mxu0 0.0
        %550 = vmatprep.subr.mxu0 0.0
        %551 = vmatpush2.xpose.msra.mxu0 0.0
        %552 = vmatprep.subr.mxu0 0.0
        %553 = vmatpush2.xpose.msra.mxu0 0.0
        %554 = vmatprep.subr.mxu0 0.0
        %555 = vmatpush2.xpose.msra.mxu0 0.0
        %556 = vmatprep.subr.mxu0 0.0
        %557 = vmatpush2.xpose.msra.mxu0 0.0
        %558 = vmatprep.subr.mxu0 0.0
        %559 = vmatpush2.xpose.msra.mxu0 0.0
        %560 = vmatprep.subr.mxu0 0.0
        %561 = vmatpush2.xpose.msra.mxu0 0.0
        %562 = vmatprep.mubr.f32.mxu0 0.0
        %563 = vmatmul.mubr.f32.gmra.mxu0 %v313
        %v564 = vpop.f32.mrf.mxu0
        %v565 = vadd.f32 %v495, %v564
        %v566 = vpop.f32.mrf.mxu0
        %567 = vdwg.mxu0
        %v568 = vrot.slane %v271, 2
        %v570 = vrot.slane %v272, 1
        %v572 = vrot.slane %v270, 7
        %v574 = vsel %vm308, %v568, %v570
        %v575 = vsel %vm310, %v574, %v273
        %v576 = vsel %vm312, %v575, %v572
        %v577 = vlaneseq
        %v578 = vshrl.u32 %v577, 7
        %v579 = vsub.s32 2, %v578
        %v580 = vrot.slane %v283, %v579
        %vm581 = vcmp.eq.s32.totalorder %v214, %v580
        %vm582 = vcmp.eq.s32.totalorder %v284, %v580
        %vm583 = vcmp.eq.s32.totalorder %v285, %v580
        %vm584 = vcmp.eq.s32.totalorder %v286, %v580
        %vm585 = vcmp.eq.s32.totalorder %v287, %v580
        %vm586 = vcmp.eq.s32.totalorder %v288, %v580
        %vm587 = vcmp.eq.s32.totalorder %v289, %v580
        %vm588 = vcmp.eq.s32.totalorder %v290, %v580
        %vm589 = vcmp.eq.s32.totalorder %v291, %v580
        %vm590 = vcmp.eq.s32.totalorder %v292, %v580
        %vm591 = vcmp.eq.s32.totalorder %v293, %v580
        %vm592 = vcmp.eq.s32.totalorder %v294, %v580
        %vm593 = vcmp.eq.s32.totalorder %v295, %v580
        %vm594 = vcmp.eq.s32.totalorder %v296, %v580
        %vm595 = vcmp.eq.s32.totalorder %v297, %v580
        %vm596 = vcmp.eq.s32.totalorder %v298, %v580
        %v597 = vsel %vm581, 1, 0
        %v598 = vsel %vm582, 1, 0
        %v599 = vsel %vm583, 1, 0
        %v600 = vsel %vm584, 1, 0
        %v601 = vsel %vm585, 1, 0
        %v602 = vsel %vm586, 1, 0
        %v603 = vsel %vm587, 1, 0
        %v604 = vsel %vm588, 1, 0
        %v605 = vsel %vm589, 1, 0
        %v606 = vsel %vm590, 1, 0
        %v607 = vsel %vm591, 1, 0
        %v608 = vsel %vm592, 1, 0
        %v609 = vsel %vm593, 1, 0
        %v610 = vsel %vm594, 1, 0
        %v611 = vsel %vm595, 1, 0
        %v612 = vsel %vm596, 1, 0
        %v613 = vcvt.s32.f32 %v597
        %v614 = vcvt.s32.f32 %v598
        %v615 = vcvt.s32.f32 %v599
        %v616 = vcvt.s32.f32 %v600
        %v617 = vcvt.s32.f32 %v601
        %v618 = vcvt.s32.f32 %v602
        %v619 = vcvt.s32.f32 %v603
        %v620 = vcvt.s32.f32 %v604
        %v621 = vcvt.s32.f32 %v605
        %v622 = vcvt.s32.f32 %v606
        %v623 = vcvt.s32.f32 %v607
        %v624 = vcvt.s32.f32 %v608
        %v625 = vcvt.s32.f32 %v609
        %v626 = vcvt.s32.f32 %v610
        %v627 = vcvt.s32.f32 %v611
        %v628 = vcvt.s32.f32 %v612
        %629 = vmatprep.subr.mxu0 0.0
        %630 = vmatpush1.xpose.msra.mxu0 %v628
        %631 = vmatprep.subr.mxu0 0.0
        %632 = vmatpush1.xpose.msra.mxu0 %v627
        %633 = vmatprep.subr.mxu0 0.0
        %634 = vmatpush1.xpose.msra.mxu0 %v626
        %635 = vmatprep.subr.mxu0 0.0
        %636 = vmatpush1.xpose.msra.mxu0 %v625
        %637 = vmatprep.subr.mxu0 0.0
        %638 = vmatpush1.xpose.msra.mxu0 %v624
        %639 = vmatprep.subr.mxu0 0.0
        %640 = vmatpush1.xpose.msra.mxu0 %v623
        %641 = vmatprep.subr.mxu0 0.0
        %642 = vmatpush1.xpose.msra.mxu0 %v622
        %643 = vmatprep.subr.mxu0 0.0
        %644 = vmatpush1.xpose.msra.mxu0 %v621
        %645 = vmatprep.subr.mxu0 0.0
        %646 = vmatpush1.xpose.msra.mxu0 %v620
        %647 = vmatprep.subr.mxu0 0.0
        %648 = vmatpush1.xpose.msra.mxu0 %v619
        %649 = vmatprep.subr.mxu0 0.0
        %650 = vmatpush1.xpose.msra.mxu0 %v618
        %651 = vmatprep.subr.mxu0 0.0
        %652 = vmatpush1.xpose.msra.mxu0 %v617
        %653 = vmatprep.subr.mxu0 0.0
        %654 = vmatpush1.xpose.msra.mxu0 %v616
        %655 = vmatprep.subr.mxu0 0.0
        %656 = vmatpush1.xpose.msra.mxu0 %v615
        %657 = vmatprep.subr.mxu0 0.0
        %658 = vmatpush1.xpose.msra.mxu0 %v614
        %659 = vmatprep.subr.mxu0 0.0
        %660 = vmatpush1.xpose.msra.mxu0 %v613
        %661 = vmatprep.subr.mxu0 0.0
        %662 = vmatpush2.xpose.msra.mxu0 0.0
        %663 = vmatprep.subr.mxu0 0.0
        %664 = vmatpush2.xpose.msra.mxu0 0.0
        %665 = vmatprep.subr.mxu0 0.0
        %666 = vmatpush2.xpose.msra.mxu0 0.0
        %667 = vmatprep.subr.mxu0 0.0
        %668 = vmatpush2.xpose.msra.mxu0 0.0
        %669 = vmatprep.subr.mxu0 0.0
        %670 = vmatpush2.xpose.msra.mxu0 0.0
        %671 = vmatprep.subr.mxu0 0.0
        %672 = vmatpush2.xpose.msra.mxu0 0.0
        %673 = vmatprep.subr.mxu0 0.0
        %674 = vmatpush2.xpose.msra.mxu0 0.0
        %675 = vmatprep.subr.mxu0 0.0
        %676 = vmatpush2.xpose.msra.mxu0 0.0
        %677 = vmatprep.subr.mxu0 0.0
        %678 = vmatpush2.xpose.msra.mxu0 0.0
        %679 = vmatprep.subr.mxu0 0.0
        %680 = vmatpush2.xpose.msra.mxu0 0.0
        %681 = vmatprep.subr.mxu0 0.0
        %682 = vmatpush2.xpose.msra.mxu0 0.0
        %683 = vmatprep.subr.mxu0 0.0
        %684 = vmatpush2.xpose.msra.mxu0 0.0
        %685 = vmatprep.subr.mxu0 0.0
        %686 = vmatpush2.xpose.msra.mxu0 0.0
        %687 = vmatprep.subr.mxu0 0.0
        %688 = vmatpush2.xpose.msra.mxu0 0.0
        %689 = vmatprep.subr.mxu0 0.0
        %690 = vmatpush2.xpose.msra.mxu0 0.0
        %691 = vmatprep.subr.mxu0 0.0
        %692 = vmatpush2.xpose.msra.mxu0 0.0
        %693 = vmatprep.mubr.f32.mxu0 0.0
        %694 = vmatmul.mubr.f32.gmra.mxu0 %v576
        %v695 = vpop.f32.mrf.mxu0
        %v696 = vadd.f32 0.0, %v695
        %v697 = vpop.f32.mrf.mxu0
        %698 = vdwg.mxu0
        %v699 = vadd.f32 %v565, %v696
        %v700 = vrot.slane %v271, 3
        %v702 = vrot.slane %v272, 2
        %v704 = vrot.slane %v273, 1
        %v706 = vsel %vm308, %v700, %v702
        %v707 = vsel %vm310, %v706, %v704
        %v708 = vsel %vm312, %v707, %v270
        %v709 = vlaneseq
        %v710 = vshrl.u32 %v709, 7
        %v711 = vsub.s32 3, %v710
        %v712 = vrot.slane %v283, %v711
        %vm713 = vcmp.eq.s32.totalorder %v214, %v712
        %vm714 = vcmp.eq.s32.totalorder %v284, %v712
        %vm715 = vcmp.eq.s32.totalorder %v285, %v712
        %vm716 = vcmp.eq.s32.totalorder %v286, %v712
        %vm717 = vcmp.eq.s32.totalorder %v287, %v712
        %vm718 = vcmp.eq.s32.totalorder %v288, %v712
        %vm719 = vcmp.eq.s32.totalorder %v289, %v712
        %vm720 = vcmp.eq.s32.totalorder %v290, %v712
        %vm721 = vcmp.eq.s32.totalorder %v291, %v712
        %vm722 = vcmp.eq.s32.totalorder %v292, %v712
        %vm723 = vcmp.eq.s32.totalorder %v293, %v712
        %vm724 = vcmp.eq.s32.totalorder %v294, %v712
        %vm725 = vcmp.eq.s32.totalorder %v295, %v712
        %vm726 = vcmp.eq.s32.totalorder %v296, %v712
        %vm727 = vcmp.eq.s32.totalorder %v297, %v712
        %vm728 = vcmp.eq.s32.totalorder %v298, %v712
        %v729 = vsel %vm713, 1, 0
        %v730 = vsel %vm714, 1, 0
        %v731 = vsel %vm715, 1, 0
        %v732 = vsel %vm716, 1, 0
        %v733 = vsel %vm717, 1, 0
        %v734 = vsel %vm718, 1, 0
        %v735 = vsel %vm719, 1, 0
        %v736 = vsel %vm720, 1, 0
        %v737 = vsel %vm721, 1, 0
        %v738 = vsel %vm722, 1, 0
        %v739 = vsel %vm723, 1, 0
        %v740 = vsel %vm724, 1, 0
        %v741 = vsel %vm725, 1, 0
        %v742 = vsel %vm726, 1, 0
        %v743 = vsel %vm727, 1, 0
        %v744 = vsel %vm728, 1, 0
        %v745 = vcvt.s32.f32 %v729
        %v746 = vcvt.s32.f32 %v730
        %v747 = vcvt.s32.f32 %v731
        %v748 = vcvt.s32.f32 %v732
        %v749 = vcvt.s32.f32 %v733
        %v750 = vcvt.s32.f32 %v734
        %v751 = vcvt.s32.f32 %v735
        %v752 = vcvt.s32.f32 %v736
        %v753 = vcvt.s32.f32 %v737
        %v754 = vcvt.s32.f32 %v738
        %v755 = vcvt.s32.f32 %v739
        %v756 = vcvt.s32.f32 %v740
        %v757 = vcvt.s32.f32 %v741
        %v758 = vcvt.s32.f32 %v742
        %v759 = vcvt.s32.f32 %v743
        %v760 = vcvt.s32.f32 %v744
        %761 = vmatprep.subr.mxu0 0.0
        %762 = vmatpush1.xpose.msra.mxu0 %v760
        %763 = vmatprep.subr.mxu0 0.0
        %764 = vmatpush1.xpose.msra.mxu0 %v759
        %765 = vmatprep.subr.mxu0 0.0
        %766 = vmatpush1.xpose.msra.mxu0 %v758
        %767 = vmatprep.subr.mxu0 0.0
        %768 = vmatpush1.xpose.msra.mxu0 %v757
        %769 = vmatprep.subr.mxu0 0.0
        %770 = vmatpush1.xpose.msra.mxu0 %v756
        %771 = vmatprep.subr.mxu0 0.0
        %772 = vmatpush1.xpose.msra.mxu0 %v755
        %773 = vmatprep.subr.mxu0 0.0
        %774 = vmatpush1.xpose.msra.mxu0 %v754
        %775 = vmatprep.subr.mxu0 0.0
        %776 = vmatpush1.xpose.msra.mxu0 %v753
        %777 = vmatprep.subr.mxu0 0.0
        %778 = vmatpush1.xpose.msra.mxu0 %v752
        %779 = vmatprep.subr.mxu0 0.0
        %780 = vmatpush1.xpose.msra.mxu0 %v751
        %781 = vmatprep.subr.mxu0 0.0
        %782 = vmatpush1.xpose.msra.mxu0 %v750
        %783 = vmatprep.subr.mxu0 0.0
        %784 = vmatpush1.xpose.msra.mxu0 %v749
        %785 = vmatprep.subr.mxu0 0.0
        %786 = vmatpush1.xpose.msra.mxu0 %v748
        %787 = vmatprep.subr.mxu0 0.0
        %788 = vmatpush1.xpose.msra.mxu0 %v747
        %789 = vmatprep.subr.mxu0 0.0
        %790 = vmatpush1.xpose.msra.mxu0 %v746
        %791 = vmatprep.subr.mxu0 0.0
        %792 = vmatpush1.xpose.msra.mxu0 %v745
        %793 = vmatprep.subr.mxu0 0.0
        %794 = vmatpush2.xpose.msra.mxu0 0.0
        %795 = vmatprep.subr.mxu0 0.0
        %796 = vmatpush2.xpose.msra.mxu0 0.0
        %797 = vmatprep.subr.mxu0 0.0
        %798 = vmatpush2.xpose.msra.mxu0 0.0
        %799 = vmatprep.subr.mxu0 0.0
        %800 = vmatpush2.xpose.msra.mxu0 0.0
        %801 = vmatprep.subr.mxu0 0.0
        %802 = vmatpush2.xpose.msra.mxu0 0.0
        %803 = vmatprep.subr.mxu0 0.0
        %804 = vmatpush2.xpose.msra.mxu0 0.0
        %805 = vmatprep.subr.mxu0 0.0
        %806 = vmatpush2.xpose.msra.mxu0 0.0
        %807 = vmatprep.subr.mxu0 0.0
        %808 = vmatpush2.xpose.msra.mxu0 0.0
        %809 = vmatprep.subr.mxu0 0.0
        %810 = vmatpush2.xpose.msra.mxu0 0.0
        %811 = vmatprep.subr.mxu0 0.0
        %812 = vmatpush2.xpose.msra.mxu0 0.0
        %813 = vmatprep.subr.mxu0 0.0
        %814 = vmatpush2.xpose.msra.mxu0 0.0
        %815 = vmatprep.subr.mxu0 0.0
        %816 = vmatpush2.xpose.msra.mxu0 0.0
        %817 = vmatprep.subr.mxu0 0.0
        %818 = vmatpush2.xpose.msra.mxu0 0.0
        %819 = vmatprep.subr.mxu0 0.0
        %820 = vmatpush2.xpose.msra.mxu0 0.0
        %821 = vmatprep.subr.mxu0 0.0
        %822 = vmatpush2.xpose.msra.mxu0 0.0
        %823 = vmatprep.subr.mxu0 0.0
        %824 = vmatpush2.xpose.msra.mxu0 0.0
        %825 = vmatprep.mubr.f32.mxu0 0.0
        %826 = vmatmul.mubr.f32.gmra.mxu0 %v708
        %v827 = vpop.f32.mrf.mxu0
        %v828 = vadd.f32 0.0, %v827
        %v829 = vpop.f32.mrf.mxu0
        %830 = vdwg.mxu0
        %v831 = vadd.f32 %v699, %v828
        %v832 = vrot.slane %v271, 4
        %v834 = vrot.slane %v272, 3
        %v836 = vrot.slane %v273, 2
        %v838 = vrot.slane %v270, 1
        %v840 = vsel %vm308, %v832, %v834
        %v841 = vsel %vm310, %v840, %v836
        %v842 = vsel %vm312, %v841, %v838
        %v843 = vlaneseq
        %v844 = vshrl.u32 %v843, 7
        %v845 = vsub.s32 4, %v844
        %v846 = vrot.slane %v283, %v845
        %vm847 = vcmp.eq.s32.totalorder %v214, %v846
        %vm848 = vcmp.eq.s32.totalorder %v284, %v846
        %vm849 = vcmp.eq.s32.totalorder %v285, %v846
        %vm850 = vcmp.eq.s32.totalorder %v286, %v846
        %vm851 = vcmp.eq.s32.totalorder %v287, %v846
        %vm852 = vcmp.eq.s32.totalorder %v288, %v846
        %vm853 = vcmp.eq.s32.totalorder %v289, %v846
        %vm854 = vcmp.eq.s32.totalorder %v290, %v846
        %vm855 = vcmp.eq.s32.totalorder %v291, %v846
        %vm856 = vcmp.eq.s32.totalorder %v292, %v846
        %vm857 = vcmp.eq.s32.totalorder %v293, %v846
        %vm858 = vcmp.eq.s32.totalorder %v294, %v846
        %vm859 = vcmp.eq.s32.totalorder %v295, %v846
        %vm860 = vcmp.eq.s32.totalorder %v296, %v846
        %vm861 = vcmp.eq.s32.totalorder %v297, %v846
        %vm862 = vcmp.eq.s32.totalorder %v298, %v846
        %v863 = vsel %vm847, 1, 0
        %v864 = vsel %vm848, 1, 0
        %v865 = vsel %vm849, 1, 0
        %v866 = vsel %vm850, 1, 0
        %v867 = vsel %vm851, 1, 0
        %v868 = vsel %vm852, 1, 0
        %v869 = vsel %vm853, 1, 0
        %v870 = vsel %vm854, 1, 0
        %v871 = vsel %vm855, 1, 0
        %v872 = vsel %vm856, 1, 0
        %v873 = vsel %vm857, 1, 0
        %v874 = vsel %vm858, 1, 0
        %v875 = vsel %vm859, 1, 0
        %v876 = vsel %vm860, 1, 0
        %v877 = vsel %vm861, 1, 0
        %v878 = vsel %vm862, 1, 0
        %v879 = vcvt.s32.f32 %v863
        %v880 = vcvt.s32.f32 %v864
        %v881 = vcvt.s32.f32 %v865
        %v882 = vcvt.s32.f32 %v866
        %v883 = vcvt.s32.f32 %v867
        %v884 = vcvt.s32.f32 %v868
        %v885 = vcvt.s32.f32 %v869
        %v886 = vcvt.s32.f32 %v870
        %v887 = vcvt.s32.f32 %v871
        %v888 = vcvt.s32.f32 %v872
        %v889 = vcvt.s32.f32 %v873
        %v890 = vcvt.s32.f32 %v874
        %v891 = vcvt.s32.f32 %v875
        %v892 = vcvt.s32.f32 %v876
        %v893 = vcvt.s32.f32 %v877
        %v894 = vcvt.s32.f32 %v878
        %895 = vmatprep.subr.mxu0 0.0
        %896 = vmatpush1.xpose.msra.mxu0 %v894
        %897 = vmatprep.subr.mxu0 0.0
        %898 = vmatpush1.xpose.msra.mxu0 %v893
        %899 = vmatprep.subr.mxu0 0.0
        %900 = vmatpush1.xpose.msra.mxu0 %v892
        %901 = vmatprep.subr.mxu0 0.0
        %902 = vmatpush1.xpose.msra.mxu0 %v891
        %903 = vmatprep.subr.mxu0 0.0
        %904 = vmatpush1.xpose.msra.mxu0 %v890
        %905 = vmatprep.subr.mxu0 0.0
        %906 = vmatpush1.xpose.msra.mxu0 %v889
        %907 = vmatprep.subr.mxu0 0.0
        %908 = vmatpush1.xpose.msra.mxu0 %v888
        %909 = vmatprep.subr.mxu0 0.0
        %910 = vmatpush1.xpose.msra.mxu0 %v887
        %911 = vmatprep.subr.mxu0 0.0
        %912 = vmatpush1.xpose.msra.mxu0 %v886
        %913 = vmatprep.subr.mxu0 0.0
        %914 = vmatpush1.xpose.msra.mxu0 %v885
        %915 = vmatprep.subr.mxu0 0.0
        %916 = vmatpush1.xpose.msra.mxu0 %v884
        %917 = vmatprep.subr.mxu0 0.0
        %918 = vmatpush1.xpose.msra.mxu0 %v883
        %919 = vmatprep.subr.mxu0 0.0
        %920 = vmatpush1.xpose.msra.mxu0 %v882
        %921 = vmatprep.subr.mxu0 0.0
        %922 = vmatpush1.xpose.msra.mxu0 %v881
        %923 = vmatprep.subr.mxu0 0.0
        %924 = vmatpush1.xpose.msra.mxu0 %v880
        %925 = vmatprep.subr.mxu0 0.0
        %926 = vmatpush1.xpose.msra.mxu0 %v879
        %927 = vmatprep.subr.mxu0 0.0
        %928 = vmatpush2.xpose.msra.mxu0 0.0
        %929 = vmatprep.subr.mxu0 0.0
        %930 = vmatpush2.xpose.msra.mxu0 0.0
        %931 = vmatprep.subr.mxu0 0.0
        %932 = vmatpush2.xpose.msra.mxu0 0.0
        %933 = vmatprep.subr.mxu0 0.0
        %934 = vmatpush2.xpose.msra.mxu0 0.0
        %935 = vmatprep.subr.mxu0 0.0
        %936 = vmatpush2.xpose.msra.mxu0 0.0
        %937 = vmatprep.subr.mxu0 0.0
        %938 = vmatpush2.xpose.msra.mxu0 0.0
        %939 = vmatprep.subr.mxu0 0.0
        %940 = vmatpush2.xpose.msra.mxu0 0.0
        %941 = vmatprep.subr.mxu0 0.0
        %942 = vmatpush2.xpose.msra.mxu0 0.0
        %943 = vmatprep.subr.mxu0 0.0
        %944 = vmatpush2.xpose.msra.mxu0 0.0
        %945 = vmatprep.subr.mxu0 0.0
        %946 = vmatpush2.xpose.msra.mxu0 0.0
        %947 = vmatprep.subr.mxu0 0.0
        %948 = vmatpush2.xpose.msra.mxu0 0.0
        %949 = vmatprep.subr.mxu0 0.0
        %950 = vmatpush2.xpose.msra.mxu0 0.0
        %951 = vmatprep.subr.mxu0 0.0
        %952 = vmatpush2.xpose.msra.mxu0 0.0
        %953 = vmatprep.subr.mxu0 0.0
        %954 = vmatpush2.xpose.msra.mxu0 0.0
        %955 = vmatprep.subr.mxu0 0.0
        %956 = vmatpush2.xpose.msra.mxu0 0.0
        %957 = vmatprep.subr.mxu0 0.0
        %958 = vmatpush2.xpose.msra.mxu0 0.0
        %959 = vmatprep.mubr.f32.mxu0 0.0
        %960 = vmatmul.mubr.f32.gmra.mxu0 %v842
        %v961 = vpop.f32.mrf.mxu0
        %v962 = vadd.f32 0.0, %v961
        %v963 = vpop.f32.mrf.mxu0
        %964 = vdwg.mxu0
        %v965 = vadd.f32 %v831, %v962
        %v966 = vrot.slane %v271, 5
        %v968 = vrot.slane %v272, 4
        %v970 = vrot.slane %v273, 3
        %v972 = vrot.slane %v270, 2
        %v974 = vsel %vm308, %v966, %v968
        %v975 = vsel %vm310, %v974, %v970
        %v976 = vsel %vm312, %v975, %v972
        %v977 = vlaneseq
        %v978 = vshrl.u32 %v977, 7
        %v979 = vsub.s32 5, %v978
        %v980 = vrot.slane %v283, %v979
        %vm981 = vcmp.eq.s32.totalorder %v214, %v980
        %vm982 = vcmp.eq.s32.totalorder %v284, %v980
        %vm983 = vcmp.eq.s32.totalorder %v285, %v980
        %vm984 = vcmp.eq.s32.totalorder %v286, %v980
        %vm985 = vcmp.eq.s32.totalorder %v287, %v980
        %vm986 = vcmp.eq.s32.totalorder %v288, %v980
        %vm987 = vcmp.eq.s32.totalorder %v289, %v980
        %vm988 = vcmp.eq.s32.totalorder %v290, %v980
        %vm989 = vcmp.eq.s32.totalorder %v291, %v980
        %vm990 = vcmp.eq.s32.totalorder %v292, %v980
        %vm991 = vcmp.eq.s32.totalorder %v293, %v980
        %vm992 = vcmp.eq.s32.totalorder %v294, %v980
        %vm993 = vcmp.eq.s32.totalorder %v295, %v980
        %vm994 = vcmp.eq.s32.totalorder %v296, %v980
        %vm995 = vcmp.eq.s32.totalorder %v297, %v980
        %vm996 = vcmp.eq.s32.totalorder %v298, %v980
        %v997 = vsel %vm981, 1, 0
        %v998 = vsel %vm982, 1, 0
        %v999 = vsel %vm983, 1, 0
        %v1000 = vsel %vm984, 1, 0
        %v1001 = vsel %vm985, 1, 0
        %v1002 = vsel %vm986, 1, 0
        %v1003 = vsel %vm987, 1, 0
        %v1004 = vsel %vm988, 1, 0
        %v1005 = vsel %vm989, 1, 0
        %v1006 = vsel %vm990, 1, 0
        %v1007 = vsel %vm991, 1, 0
        %v1008 = vsel %vm992, 1, 0
        %v1009 = vsel %vm993, 1, 0
        %v1010 = vsel %vm994, 1, 0
        %v1011 = vsel %vm995, 1, 0
        %v1012 = vsel %vm996, 1, 0
        %v1013 = vcvt.s32.f32 %v997
        %v1014 = vcvt.s32.f32 %v998
        %v1015 = vcvt.s32.f32 %v999
        %v1016 = vcvt.s32.f32 %v1000
        %v1017 = vcvt.s32.f32 %v1001
        %v1018 = vcvt.s32.f32 %v1002
        %v1019 = vcvt.s32.f32 %v1003
        %v1020 = vcvt.s32.f32 %v1004
        %v1021 = vcvt.s32.f32 %v1005
        %v1022 = vcvt.s32.f32 %v1006
        %v1023 = vcvt.s32.f32 %v1007
        %v1024 = vcvt.s32.f32 %v1008
        %v1025 = vcvt.s32.f32 %v1009
        %v1026 = vcvt.s32.f32 %v1010
        %v1027 = vcvt.s32.f32 %v1011
        %v1028 = vcvt.s32.f32 %v1012
        %1029 = vmatprep.subr.mxu0 0.0
        %1030 = vmatpush1.xpose.msra.mxu0 %v1028
        %1031 = vmatprep.subr.mxu0 0.0
        %1032 = vmatpush1.xpose.msra.mxu0 %v1027
        %1033 = vmatprep.subr.mxu0 0.0
        %1034 = vmatpush1.xpose.msra.mxu0 %v1026
        %1035 = vmatprep.subr.mxu0 0.0
        %1036 = vmatpush1.xpose.msra.mxu0 %v1025
        %1037 = vmatprep.subr.mxu0 0.0
        %1038 = vmatpush1.xpose.msra.mxu0 %v1024
        %1039 = vmatprep.subr.mxu0 0.0
        %1040 = vmatpush1.xpose.msra.mxu0 %v1023
        %1041 = vmatprep.subr.mxu0 0.0
        %1042 = vmatpush1.xpose.msra.mxu0 %v1022
        %1043 = vmatprep.subr.mxu0 0.0
        %1044 = vmatpush1.xpose.msra.mxu0 %v1021
        %1045 = vmatprep.subr.mxu0 0.0
        %1046 = vmatpush1.xpose.msra.mxu0 %v1020
        %1047 = vmatprep.subr.mxu0 0.0
        %1048 = vmatpush1.xpose.msra.mxu0 %v1019
        %1049 = vmatprep.subr.mxu0 0.0
        %1050 = vmatpush1.xpose.msra.mxu0 %v1018
        %1051 = vmatprep.subr.mxu0 0.0
        %1052 = vmatpush1.xpose.msra.mxu0 %v1017
        %1053 = vmatprep.subr.mxu0 0.0
        %1054 = vmatpush1.xpose.msra.mxu0 %v1016
        %1055 = vmatprep.subr.mxu0 0.0
        %1056 = vmatpush1.xpose.msra.mxu0 %v1015
        %1057 = vmatprep.subr.mxu0 0.0
        %1058 = vmatpush1.xpose.msra.mxu0 %v1014
        %1059 = vmatprep.subr.mxu0 0.0
        %1060 = vmatpush1.xpose.msra.mxu0 %v1013
        %1061 = vmatprep.subr.mxu0 0.0
        %1062 = vmatpush2.xpose.msra.mxu0 0.0
        %1063 = vmatprep.subr.mxu0 0.0
        %1064 = vmatpush2.xpose.msra.mxu0 0.0
        %1065 = vmatprep.subr.mxu0 0.0
        %1066 = vmatpush2.xpose.msra.mxu0 0.0
        %1067 = vmatprep.subr.mxu0 0.0
        %1068 = vmatpush2.xpose.msra.mxu0 0.0
        %1069 = vmatprep.subr.mxu0 0.0
        %1070 = vmatpush2.xpose.msra.mxu0 0.0
        %1071 = vmatprep.subr.mxu0 0.0
        %1072 = vmatpush2.xpose.msra.mxu0 0.0
        %1073 = vmatprep.subr.mxu0 0.0
        %1074 = vmatpush2.xpose.msra.mxu0 0.0
        %1075 = vmatprep.subr.mxu0 0.0
        %1076 = vmatpush2.xpose.msra.mxu0 0.0
        %1077 = vmatprep.subr.mxu0 0.0
        %1078 = vmatpush2.xpose.msra.mxu0 0.0
        %1079 = vmatprep.subr.mxu0 0.0
        %1080 = vmatpush2.xpose.msra.mxu0 0.0
        %1081 = vmatprep.subr.mxu0 0.0
        %1082 = vmatpush2.xpose.msra.mxu0 0.0
        %1083 = vmatprep.subr.mxu0 0.0
        %1084 = vmatpush2.xpose.msra.mxu0 0.0
        %1085 = vmatprep.subr.mxu0 0.0
        %1086 = vmatpush2.xpose.msra.mxu0 0.0
        %1087 = vmatprep.subr.mxu0 0.0
        %1088 = vmatpush2.xpose.msra.mxu0 0.0
        %1089 = vmatprep.subr.mxu0 0.0
        %1090 = vmatpush2.xpose.msra.mxu0 0.0
        %1091 = vmatprep.subr.mxu0 0.0
        %1092 = vmatpush2.xpose.msra.mxu0 0.0
        %1093 = vmatprep.mubr.f32.mxu0 0.0
        %1094 = vmatmul.mubr.f32.gmra.mxu0 %v976
        %v1095 = vpop.f32.mrf.mxu0
        %v1096 = vadd.f32 0.0, %v1095
        %v1097 = vpop.f32.mrf.mxu0
        %1098 = vdwg.mxu0
        %v1099 = vadd.f32 %v965, %v1096
        %v1100 = vrot.slane %v271, 6
        %v1102 = vrot.slane %v272, 5
        %v1104 = vrot.slane %v273, 4
        %v1106 = vrot.slane %v270, 3
        %v1108 = vsel %vm308, %v1100, %v1102
        %v1109 = vsel %vm310, %v1108, %v1104
        %v1110 = vsel %vm312, %v1109, %v1106
        %v1111 = vlaneseq
        %v1112 = vshrl.u32 %v1111, 7
        %v1113 = vsub.s32 6, %v1112
        %v1114 = vrot.slane %v283, %v1113
        %vm1115 = vcmp.eq.s32.totalorder %v214, %v1114
        %vm1116 = vcmp.eq.s32.totalorder %v284, %v1114
        %vm1117 = vcmp.eq.s32.totalorder %v285, %v1114
        %vm1118 = vcmp.eq.s32.totalorder %v286, %v1114
        %vm1119 = vcmp.eq.s32.totalorder %v287, %v1114
        %vm1120 = vcmp.eq.s32.totalorder %v288, %v1114
        %vm1121 = vcmp.eq.s32.totalorder %v289, %v1114
        %vm1122 = vcmp.eq.s32.totalorder %v290, %v1114
        %vm1123 = vcmp.eq.s32.totalorder %v291, %v1114
        %vm1124 = vcmp.eq.s32.totalorder %v292, %v1114
        %vm1125 = vcmp.eq.s32.totalorder %v293, %v1114
        %vm1126 = vcmp.eq.s32.totalorder %v294, %v1114
        %vm1127 = vcmp.eq.s32.totalorder %v295, %v1114
        %vm1128 = vcmp.eq.s32.totalorder %v296, %v1114
        %vm1129 = vcmp.eq.s32.totalorder %v297, %v1114
        %vm1130 = vcmp.eq.s32.totalorder %v298, %v1114
        %v1131 = vsel %vm1115, 1, 0
        %v1132 = vsel %vm1116, 1, 0
        %v1133 = vsel %vm1117, 1, 0
        %v1134 = vsel %vm1118, 1, 0
        %v1135 = vsel %vm1119, 1, 0
        %v1136 = vsel %vm1120, 1, 0
        %v1137 = vsel %vm1121, 1, 0
        %v1138 = vsel %vm1122, 1, 0
        %v1139 = vsel %vm1123, 1, 0
        %v1140 = vsel %vm1124, 1, 0
        %v1141 = vsel %vm1125, 1, 0
        %v1142 = vsel %vm1126, 1, 0
        %v1143 = vsel %vm1127, 1, 0
        %v1144 = vsel %vm1128, 1, 0
        %v1145 = vsel %vm1129, 1, 0
        %v1146 = vsel %vm1130, 1, 0
        %v1147 = vcvt.s32.f32 %v1131
        %v1148 = vcvt.s32.f32 %v1132
        %v1149 = vcvt.s32.f32 %v1133
        %v1150 = vcvt.s32.f32 %v1134
        %v1151 = vcvt.s32.f32 %v1135
        %v1152 = vcvt.s32.f32 %v1136
        %v1153 = vcvt.s32.f32 %v1137
        %v1154 = vcvt.s32.f32 %v1138
        %v1155 = vcvt.s32.f32 %v1139
        %v1156 = vcvt.s32.f32 %v1140
        %v1157 = vcvt.s32.f32 %v1141
        %v1158 = vcvt.s32.f32 %v1142
        %v1159 = vcvt.s32.f32 %v1143
        %v1160 = vcvt.s32.f32 %v1144
        %v1161 = vcvt.s32.f32 %v1145
        %v1162 = vcvt.s32.f32 %v1146
        %1163 = vmatprep.subr.mxu0 0.0
        %1164 = vmatpush1.xpose.msra.mxu0 %v1162
        %1165 = vmatprep.subr.mxu0 0.0
        %1166 = vmatpush1.xpose.msra.mxu0 %v1161
        %1167 = vmatprep.subr.mxu0 0.0
        %1168 = vmatpush1.xpose.msra.mxu0 %v1160
        %1169 = vmatprep.subr.mxu0 0.0
        %1170 = vmatpush1.xpose.msra.mxu0 %v1159
        %1171 = vmatprep.subr.mxu0 0.0
        %1172 = vmatpush1.xpose.msra.mxu0 %v1158
        %1173 = vmatprep.subr.mxu0 0.0
        %1174 = vmatpush1.xpose.msra.mxu0 %v1157
        %1175 = vmatprep.subr.mxu0 0.0
        %1176 = vmatpush1.xpose.msra.mxu0 %v1156
        %1177 = vmatprep.subr.mxu0 0.0
        %1178 = vmatpush1.xpose.msra.mxu0 %v1155
        %1179 = vmatprep.subr.mxu0 0.0
        %1180 = vmatpush1.xpose.msra.mxu0 %v1154
        %1181 = vmatprep.subr.mxu0 0.0
        %1182 = vmatpush1.xpose.msra.mxu0 %v1153
        %1183 = vmatprep.subr.mxu0 0.0
        %1184 = vmatpush1.xpose.msra.mxu0 %v1152
        %1185 = vmatprep.subr.mxu0 0.0
        %1186 = vmatpush1.xpose.msra.mxu0 %v1151
        %1187 = vmatprep.subr.mxu0 0.0
        %1188 = vmatpush1.xpose.msra.mxu0 %v1150
        %1189 = vmatprep.subr.mxu0 0.0
        %1190 = vmatpush1.xpose.msra.mxu0 %v1149
        %1191 = vmatprep.subr.mxu0 0.0
        %1192 = vmatpush1.xpose.msra.mxu0 %v1148
        %1193 = vmatprep.subr.mxu0 0.0
        %1194 = vmatpush1.xpose.msra.mxu0 %v1147
        %1195 = vmatprep.subr.mxu0 0.0
        %1196 = vmatpush2.xpose.msra.mxu0 0.0
        %1197 = vmatprep.subr.mxu0 0.0
        %1198 = vmatpush2.xpose.msra.mxu0 0.0
        %1199 = vmatprep.subr.mxu0 0.0
        %1200 = vmatpush2.xpose.msra.mxu0 0.0
        %1201 = vmatprep.subr.mxu0 0.0
        %1202 = vmatpush2.xpose.msra.mxu0 0.0
        %1203 = vmatprep.subr.mxu0 0.0
        %1204 = vmatpush2.xpose.msra.mxu0 0.0
        %1205 = vmatprep.subr.mxu0 0.0
        %1206 = vmatpush2.xpose.msra.mxu0 0.0
        %1207 = vmatprep.subr.mxu0 0.0
        %1208 = vmatpush2.xpose.msra.mxu0 0.0
        %1209 = vmatprep.subr.mxu0 0.0
        %1210 = vmatpush2.xpose.msra.mxu0 0.0
        %1211 = vmatprep.subr.mxu0 0.0
        %1212 = vmatpush2.xpose.msra.mxu0 0.0
        %1213 = vmatprep.subr.mxu0 0.0
        %1214 = vmatpush2.xpose.msra.mxu0 0.0
        %1215 = vmatprep.subr.mxu0 0.0
        %1216 = vmatpush2.xpose.msra.mxu0 0.0
        %1217 = vmatprep.subr.mxu0 0.0
        %1218 = vmatpush2.xpose.msra.mxu0 0.0
        %1219 = vmatprep.subr.mxu0 0.0
        %1220 = vmatpush2.xpose.msra.mxu0 0.0
        %1221 = vmatprep.subr.mxu0 0.0
        %1222 = vmatpush2.xpose.msra.mxu0 0.0
        %1223 = vmatprep.subr.mxu0 0.0
        %1224 = vmatpush2.xpose.msra.mxu0 0.0
        %1225 = vmatprep.subr.mxu0 0.0
        %1226 = vmatpush2.xpose.msra.mxu0 0.0
        %1227 = vmatprep.mubr.f32.mxu0 0.0
        %1228 = vmatmul.mubr.f32.gmra.mxu0 %v1110
        %v1229 = vpop.f32.mrf.mxu0
        %v1230 = vadd.f32 0.0, %v1229
        %v1231 = vpop.f32.mrf.mxu0
        %1232 = vdwg.mxu0
        %v1233 = vadd.f32 %v1099, %v1230
        %v1234 = vrot.slane %v271, 7
        %v1236 = vrot.slane %v272, 6
        %v1238 = vrot.slane %v273, 5
        %v1240 = vrot.slane %v270, 4
        %v1242 = vsel %vm308, %v1234, %v1236
        %v1243 = vsel %vm310, %v1242, %v1238
        %v1244 = vsel %vm312, %v1243, %v1240
        %v1245 = vlaneseq
        %v1246 = vshrl.u32 %v1245, 7
        %v1247 = vsub.s32 7, %v1246
        %v1248 = vrot.slane %v283, %v1247
        %vm1249 = vcmp.eq.s32.totalorder %v214, %v1248
        %vm1250 = vcmp.eq.s32.totalorder %v284, %v1248
        %vm1251 = vcmp.eq.s32.totalorder %v285, %v1248
        %vm1252 = vcmp.eq.s32.totalorder %v286, %v1248
        %vm1253 = vcmp.eq.s32.totalorder %v287, %v1248
        %vm1254 = vcmp.eq.s32.totalorder %v288, %v1248
        %vm1255 = vcmp.eq.s32.totalorder %v289, %v1248
        %vm1256 = vcmp.eq.s32.totalorder %v290, %v1248
        %vm1257 = vcmp.eq.s32.totalorder %v291, %v1248
        %vm1258 = vcmp.eq.s32.totalorder %v292, %v1248
        %vm1259 = vcmp.eq.s32.totalorder %v293, %v1248
        %vm1260 = vcmp.eq.s32.totalorder %v294, %v1248
        %vm1261 = vcmp.eq.s32.totalorder %v295, %v1248
        %vm1262 = vcmp.eq.s32.totalorder %v296, %v1248
        %vm1263 = vcmp.eq.s32.totalorder %v297, %v1248
        %vm1264 = vcmp.eq.s32.totalorder %v298, %v1248
        %v1265 = vsel %vm1249, 1, 0
        %v1266 = vsel %vm1250, 1, 0
        %v1267 = vsel %vm1251, 1, 0
        %v1268 = vsel %vm1252, 1, 0
        %v1269 = vsel %vm1253, 1, 0
        %v1270 = vsel %vm1254, 1, 0
        %v1271 = vsel %vm1255, 1, 0
        %v1272 = vsel %vm1256, 1, 0
        %v1273 = vsel %vm1257, 1, 0
        %v1274 = vsel %vm1258, 1, 0
        %v1275 = vsel %vm1259, 1, 0
        %v1276 = vsel %vm1260, 1, 0
        %v1277 = vsel %vm1261, 1, 0
        %v1278 = vsel %vm1262, 1, 0
        %v1279 = vsel %vm1263, 1, 0
        %v1280 = vsel %vm1264, 1, 0
        %v1281 = vcvt.s32.f32 %v1265
        %v1282 = vcvt.s32.f32 %v1266
        %v1283 = vcvt.s32.f32 %v1267
        %v1284 = vcvt.s32.f32 %v1268
        %v1285 = vcvt.s32.f32 %v1269
        %v1286 = vcvt.s32.f32 %v1270
        %v1287 = vcvt.s32.f32 %v1271
        %v1288 = vcvt.s32.f32 %v1272
        %v1289 = vcvt.s32.f32 %v1273
        %v1290 = vcvt.s32.f32 %v1274
        %v1291 = vcvt.s32.f32 %v1275
        %v1292 = vcvt.s32.f32 %v1276
        %v1293 = vcvt.s32.f32 %v1277
        %v1294 = vcvt.s32.f32 %v1278
        %v1295 = vcvt.s32.f32 %v1279
        %v1296 = vcvt.s32.f32 %v1280
        %1297 = vmatprep.subr.mxu0 0.0
        %1298 = vmatpush1.xpose.msra.mxu0 %v1296
        %1299 = vmatprep.subr.mxu0 0.0
        %1300 = vmatpush1.xpose.msra.mxu0 %v1295
        %1301 = vmatprep.subr.mxu0 0.0
        %1302 = vmatpush1.xpose.msra.mxu0 %v1294
        %1303 = vmatprep.subr.mxu0 0.0
        %1304 = vmatpush1.xpose.msra.mxu0 %v1293
        %1305 = vmatprep.subr.mxu0 0.0
        %1306 = vmatpush1.xpose.msra.mxu0 %v1292
        %1307 = vmatprep.subr.mxu0 0.0
        %1308 = vmatpush1.xpose.msra.mxu0 %v1291
        %1309 = vmatprep.subr.mxu0 0.0
        %1310 = vmatpush1.xpose.msra.mxu0 %v1290
        %1311 = vmatprep.subr.mxu0 0.0
        %1312 = vmatpush1.xpose.msra.mxu0 %v1289
        %1313 = vmatprep.subr.mxu0 0.0
        %1314 = vmatpush1.xpose.msra.mxu0 %v1288
        %1315 = vmatprep.subr.mxu0 0.0
        %1316 = vmatpush1.xpose.msra.mxu0 %v1287
        %1317 = vmatprep.subr.mxu0 0.0
        %1318 = vmatpush1.xpose.msra.mxu0 %v1286
        %1319 = vmatprep.subr.mxu0 0.0
        %1320 = vmatpush1.xpose.msra.mxu0 %v1285
        %1321 = vmatprep.subr.mxu0 0.0
        %1322 = vmatpush1.xpose.msra.mxu0 %v1284
        %1323 = vmatprep.subr.mxu0 0.0
        %1324 = vmatpush1.xpose.msra.mxu0 %v1283
        %1325 = vmatprep.subr.mxu0 0.0
        %1326 = vmatpush1.xpose.msra.mxu0 %v1282
        %1327 = vmatprep.subr.mxu0 0.0
        %1328 = vmatpush1.xpose.msra.mxu0 %v1281
        %1329 = vmatprep.subr.mxu0 0.0
        %1330 = vmatpush2.xpose.msra.mxu0 0.0
        %1331 = vmatprep.subr.mxu0 0.0
        %1332 = vmatpush2.xpose.msra.mxu0 0.0
        %1333 = vmatprep.subr.mxu0 0.0
        %1334 = vmatpush2.xpose.msra.mxu0 0.0
        %1335 = vmatprep.subr.mxu0 0.0
        %1336 = vmatpush2.xpose.msra.mxu0 0.0
        %1337 = vmatprep.subr.mxu0 0.0
        %1338 = vmatpush2.xpose.msra.mxu0 0.0
        %1339 = vmatprep.subr.mxu0 0.0
        %1340 = vmatpush2.xpose.msra.mxu0 0.0
        %1341 = vmatprep.subr.mxu0 0.0
        %1342 = vmatpush2.xpose.msra.mxu0 0.0
        %1343 = vmatprep.subr.mxu0 0.0
        %1344 = vmatpush2.xpose.msra.mxu0 0.0
        %1345 = vmatprep.subr.mxu0 0.0
        %1346 = vmatpush2.xpose.msra.mxu0 0.0
        %1347 = vmatprep.subr.mxu0 0.0
        %1348 = vmatpush2.xpose.msra.mxu0 0.0
        %1349 = vmatprep.subr.mxu0 0.0
        %1350 = vmatpush2.xpose.msra.mxu0 0.0
        %1351 = vmatprep.subr.mxu0 0.0
        %1352 = vmatpush2.xpose.msra.mxu0 0.0
        %1353 = vmatprep.subr.mxu0 0.0
        %1354 = vmatpush2.xpose.msra.mxu0 0.0
        %1355 = vmatprep.subr.mxu0 0.0
        %1356 = vmatpush2.xpose.msra.mxu0 0.0
        %1357 = vmatprep.subr.mxu0 0.0
        %1358 = vmatpush2.xpose.msra.mxu0 0.0
        %1359 = vmatprep.subr.mxu0 0.0
        %1360 = vmatpush2.xpose.msra.mxu0 0.0
        %1361 = vmatprep.mubr.f32.mxu0 0.0
        %1362 = vmatmul.mubr.f32.gmra.mxu0 %v1244
        %v1363 = vpop.f32.mrf.mxu0
        %v1364 = vadd.f32 0.0, %v1363
        %v1365 = vpop.f32.mrf.mxu0
        %1366 = vdwg.mxu0
        %v1367 = vadd.f32 %v1233, %v1364
        %v1368 = vld [vmem:[#allocation2] sm:$0xf]
        %v1369 = vadd.f32 %v1368, %v1367
        %1370 = vst [vmem:[#allocation2] sm:$0xf] %v1369
        // Predicated region
        $region37: #{tpu_custom_call.1} parent=31 // pred_check
          %p1371 = pneg %p198
        $region38: #{tpu_custom_call.1} parent=31 // pred_check_branch
          %1373 = sbr.rel (%p1371) target = $region40
        $region39: #{tpu_custom_call.1} parent=31 // pred_region
          %v1374 = vld [vmem:[#allocation2] sm:$0xf]
          %v1375 = vld [vmem:[%s1] sm:$0xff]
          %1377 = vset.pattern.permute.xlu0 0
          %1378 = vperm.xlu0 %1377, %v1375
          %v1379 = vpop.permute.xlu0 %1378
          %v1381 = vlaneseq
          %v1382 = vshrl.u32 %v1381, 7
          %v1383 = vsub.s32 0, %v1382
          %v1384 = vrot.slane %v1374, %v1383
          %v1385 = vmul.f32 %v1379, %v1384
          %1386 = vset.pattern.permute.xlu0 1
          %1387 = vperm.xlu0 %1386, %v1375
          %v1388 = vpop.permute.xlu0 %1387
          %v1390 = vlaneseq
          %v1391 = vshrl.u32 %v1390, 7
          %v1392 = vsub.s32 1, %v1391
          %v1393 = vrot.slane %v1374, %v1392
          %v1394 = vmul.f32 %v1388, %v1393
          %v1395 = vadd.f32 %v1385, %v1394
          %1396 = vset.pattern.permute.xlu0 2
          %1397 = vperm.xlu0 %1396, %v1375
          %v1398 = vpop.permute.xlu0 %1397
          %v1400 = vlaneseq
          %v1401 = vshrl.u32 %v1400, 7
          %v1402 = vsub.s32 2, %v1401
          %v1403 = vrot.slane %v1374, %v1402
          %v1404 = vmul.f32 %v1398, %v1403
          %v1405 = vadd.f32 %v1395, %v1404
          %v1406 = vld [vmem:[%s2] sm:$0xff]
          %1408 = vset.pattern.permute.xlu0 0
          %1409 = vperm.xlu0 %1408, %v1406
          %v1410 = vpop.permute.xlu0 %1409
          %v1412 = vlaneseq
          %v1413 = vshrl.u32 %v1412, 7
          %v1414 = vsub.s32 3, %v1413
          %v1415 = vrot.slane %v1374, %v1414
          %v1416 = vmul.f32 %v1410, %v1415
          %v1417 = vadd.f32 %v1405, %v1416
          %v1418 = vmax.f32 %v1374, 1.0
          %v1419 = vlaneseq
          %v1420 = vshrl.u32 %v1419, 7
          %v1421 = vsub.s32 3, %v1420
          %v1422 = vrot.slane %v1418, %v1421
          %v1423 = vrcp.pop %v1422
          %v1424 = vmul.f32 %v1417, %v1423
          %1425 = vst [vmem:[%s190] sm:$0xff] %v1424
        $region40: #{tpu_custom_call.1} parent=31 // pred_fallthru
          _
        %s1426 = sand.u32 %s116, 1
        %s1427 = scalar_lea.sflag [#allocation4], %s1426
        %s1428 = sand.u32 %s116, 1
        %s1429 = smul.addr %s1428, 8
        %s1430 = scalar_lea.vmem [#allocation3], %s1429
        // Predicated region
        $region41: #{tpu_custom_call.1} parent=31 // pred_check
          %p1431 = pneg %p126
        $region42: #{tpu_custom_call.1} parent=31 // pred_check_branch
          %1433 = sbr.rel (%p1431) target = $region44
        $region43: #{tpu_custom_call.1} parent=31 // pred_region
          %s1435 = ssub.s32 128, 128
          %1436 = vsyncadd %s1427, %s1435
          %s1437 = sadd.s32 %s23, %s22
          %s1438 = smul.addr %s1437, 128
          %s1439 = scalar_lea.hbm %s3, %s1438
          %s1441 = sshll.u32 %s1430, 4
          %s1442 = int_to_ptr.vmem [resolvable:$true] %s1441
          %1444 = dma.vmem_to_hbm [thread:$0]  %s1442, 128, %s1439, %s1427
        $region44: #{tpu_custom_call.1} parent=31 // pred_fallthru
          _
      $region32: #{tpu_custom_call.1} parent=5 // pred_fallthru
        _
      %p1445 = scmp.le.s32.totalorder 2, %s12
      // Predicated region
      $region45: #{tpu_custom_call.1} parent=5 // pred_check
        %p1446 = pneg %p1445
      $region46: #{tpu_custom_call.1} parent=5 // pred_check_branch
        %1448 = sbr.rel (%p1446) target = $region48
      $region47: #{tpu_custom_call.1} parent=5 // pred_region
        %s1449 = ssub.s32 %s12, 2
        // Predicated region
        $region49: #{tpu_custom_call.1} parent=47 // pred_check
          %p1450 = pneg %p132
        $region50: #{tpu_custom_call.1} parent=47 // pred_check_branch
          %1452 = sbr.rel (%p1450) target = $region52
        $region51: #{tpu_custom_call.1} parent=47 // pred_region
          %s1453 = sand.u32 %s117, 1
          %s1454 = scalar_lea.sflag [#allocation4], %s1453
          %s1455 = sand.u32 %s117, 1
          %s1456 = smul.addr %s1455, 8
          %s1457 = scalar_lea.vmem [#allocation3], %s1456
          %1458 = dma.done %s1454, 128
        $region52: #{tpu_custom_call.1} parent=47 // pred_fallthru
          _
      $region48: #{tpu_custom_call.1} parent=5 // pred_fallthru
        _
    $region6: #{tpu_custom_call.1} parent=1 // loop_footer
      %s16 = sadd.s32 1, %s12
    $region7: #{tpu_custom_call.1} parent=1 // loop_footer_branch
      %11 = sbr.rel target = $region3
    $region8: #{tpu_custom_call.1} parent=1 // loop_exit
      _
    %1459 = vsyncpa [#allocation4], 1
    %s1460 = scalar_lea.sflag [#allocation4], 1
    %1461 = vsyncpa %s1460, 1

</llo_original>
